<compile_context>
chip_gen: v5e
topology: v5e:2x2
jax: 0.10.0
libtpu: 0.0.40
codegen_flags: <defaults>
</compile_context>

<pallas_src>
import jax
import jax.numpy as jnp
from jax import lax
from jax.experimental import pallas as pl
from jax.experimental.pallas import tpu as pltpu


def _round_up(v, m):
    return ((v + m - 1) // m) * m


def _build_fused_cnn_call(batch, b_tile, xdim, ksize, cdims, hdims, ydim):
    assert ksize == 3, "module hard-codes Conv2d(..., padding=1); only ksize=3 is 'same'"
    C0, H, W = xdim
    assert batch % b_tile == 0
    G = batch // b_tile
    B = b_tile
    n_conv = len(cdims)
    chans = [C0] + list(cdims)
    hs, ws = [H], [W]
    for _ in cdims:
        assert hs[-1] % 2 == 0 and ws[-1] % 2 == 0
        hs.append(hs[-1] // 2)
        ws.append(ws[-1] // 2)
    fdims = list(hdims) + [ydim]
    n_fc = len(fdims)
    d_flat = chans[-1] * hs[-1] * ws[-1]
    ydim_pad = _round_up(ydim, 128)

    kk = ksize * ksize
    wdtype = jnp.bfloat16

    # static per-stage geometry
    hw_s = [hs[s] * ws[s] for s in range(n_conv)]
    off_s = [ws[s] + 1 for s in range(n_conv)]                        # interior offset
    padlen_s = [_round_up(hw_s[s] + 2 * ws[s] + 2, 128) for s in range(n_conv)]
    ylen_s = [_round_up(hw_s[s] + ws[s] + 2, 128) for s in range(n_conv)]

    def kernel(*refs):
        it = iter(refs)
        x_ref = next(it)
        conv_w, conv_b, pool_sel = [], [], []
        for _ in range(n_conv):
            conv_w.append(next(it))
            conv_b.append(next(it))
            pool_sel.append(next(it))
        fc_w, fc_b = [], []
        for _ in range(n_fc):
            fc_w.append(next(it))
            fc_b.append(next(it))
        o_ref = next(it)
        padv, imcol, ybuf = [], [], []
        for _ in range(n_conv):
            padv.append(next(it))
            imcol.append(next(it))
            ybuf.append(next(it))
        a2_s = next(it)

        act = x_ref[0]                                   # (C0*B, H*W) f32, lane-dense
        for s in range(n_conv):
            h, w = hs[s], ws[s]
            hw, off = hw_s[s], off_s[s]
            cinB = chans[s] * B
            coutB = chans[s + 1] * B
            pv, ic, yb = padv[s], imcol[s], ybuf[s]
            padlen, ylen = padlen_s[s], ylen_s[s]

            # ---- zero padding: refresh only the small border lanes; the
            #      interior is fully overwritten each step ----
            pv[:, 0:off] = jnp.zeros((cinB, off), jnp.float32)
            pv[:, off + hw:padlen] = jnp.zeros((cinB, padlen - off - hw), jnp.float32)
            pv[:, off:off + hw] = act                    # lane-dense store

            # ---- im2col staging (rows = (dy,dx,cin,b), lanes = h*w) ----
            lane = lax.broadcasted_iota(jnp.int32, (1, hw), 1)
            colid = lane % w
            for t in range(kk):
                dy, dx = t // ksize, t % ksize
                start = off + (dy - 1) * w + (dx - 1)
                shifted = pv[:, start:start + hw]        # (cinB, hw); vertical pad = real zeros
                cc = colid + (dx - 1)
                validc = jnp.logical_and(cc >= 0, cc < w)
                ic[t * cinB:(t + 1) * cinB, :] = (
                    jnp.where(validc, shifted, 0.0).astype(wdtype))

            # ---- conv: ONE MXU matmul (batch tile folded block-diagonally) ----
            y = jnp.dot(conv_w[s][...], ic[...], preferred_element_type=jnp.float32)
            y = jnp.maximum(y + conv_b[s][...], 0.0)     # bias + ReLU, (coutB, hw) f32

            # ---- 2x2/2 max-pool: window max via shifted lane reads, stride-2
            #      compaction via a tiny 0/1 anchor-selection matmul ----
            yb[:, hw:ylen] = jnp.zeros((coutB, ylen - hw), jnp.float32)
            yb[:, 0:hw] = y
            m4 = jnp.maximum(
                jnp.maximum(y, yb[:, 1:1 + hw]),
                jnp.maximum(yb[:, w:w + hw], yb[:, w + 1:w + 1 + hw]))
            act = jnp.dot(m4, pool_sel[s][...], preferred_element_type=jnp.float32)
            # TODO(synk): Dropout2d(p=0.5) -> identity (inference mode).

        # ---- flatten + fc1: channel-major rows make per-channel fc1 chunks
        #      contiguous -> no per-position store loop, no relayout ----
        c_last = chans[-1]
        p_last = hs[-1] * ws[-1]
        h1 = fdims[0]
        a2_s[...] = act                                  # (c_last*B, p_last)
        z = jnp.zeros((B, h1), jnp.float32)
        for c in range(c_last):
            rows = a2_s[c * B:(c + 1) * B, :].astype(wdtype)          # (B, p_last)
            wchunk = fc_w[0][c * p_last:(c + 1) * p_last, :]          # (p_last, h1)
            z = z + jnp.dot(rows, wchunk, preferred_element_type=jnp.float32)
        z = jnp.maximum(z + fc_b[0][...], 0.0)

        # ---- remaining MLP head (batch tile is the M dim) ----
        for li in range(1, n_fc):
            z = jnp.dot(z.astype(wdtype), fc_w[li][...],
                        preferred_element_type=jnp.float32) + fc_b[li][...]
            if li < n_fc - 1:
                z = jnp.maximum(z, 0.0)
        o_ref[0] = z                                     # (B, ydim_pad), lane-dense

    # ---- specs ----
    in_specs = [pl.BlockSpec((1, C0 * B, H * W), lambda g: (g, 0, 0))]
    for s in range(n_conv):
        cinB = chans[s] * B
        coutB = chans[s + 1] * B
        in_specs.append(pl.BlockSpec((coutB, kk * cinB), lambda g: (0, 0)))
        in_specs.append(pl.BlockSpec((coutB, 1), lambda g: (0, 0)))
        in_specs.append(pl.BlockSpec((hw_s[s], hs[s + 1] * ws[s + 1]), lambda g: (0, 0)))
    prev_d = d_flat
    for li, d in enumerate(fdims):
        dcols = ydim_pad if li == n_fc - 1 else d
        in_specs.append(pl.BlockSpec((prev_d, dcols), lambda g: (0, 0)))
        in_specs.append(pl.BlockSpec((1, dcols), lambda g: (0, 0)))
        prev_d = d
    out_specs = pl.BlockSpec((1, B, ydim_pad), lambda g: (g, 0, 0))

    scratch_shapes = []
    for s in range(n_conv):
        cinB = chans[s] * B
        coutB = chans[s + 1] * B
        scratch_shapes.append(pltpu.VMEM((cinB, padlen_s[s]), jnp.float32))   # padded rows
        scratch_shapes.append(pltpu.VMEM((kk * cinB, hw_s[s]), wdtype))       # im2col
        scratch_shapes.append(pltpu.VMEM((coutB, ylen_s[s]), jnp.float32))    # pool staging
    scratch_shapes.append(pltpu.VMEM((chans[-1] * B, hs[-1] * ws[-1]), jnp.float32))

    # rough cost hint for XLA scheduling
    flops = 0
    for s in range(n_conv):
        cinB = chans[s] * B
        coutB = chans[s + 1] * B
        flops += 2 * coutB * (kk * cinB) * hw_s[s]
        flops += 2 * coutB * hw_s[s] * (hs[s + 1] * ws[s + 1])
    prev_d = d_flat
    for li, d in enumerate(fdims):
        dcols = ydim_pad if li == n_fc - 1 else d
        flops += 2 * B * prev_d * dcols
        prev_d = d
    flops *= G
    bytes_accessed = 4 * batch * (C0 * H * W + ydim_pad)
    for s in range(n_conv):
        bytes_accessed += G * 2 * (chans[s + 1] * B) * (kk * chans[s] * B)
        bytes_accessed += G * 4 * hw_s[s] * (hs[s + 1] * ws[s + 1])
    prev_d = d_flat
    for li, d in enumerate(fdims):
        dcols = ydim_pad if li == n_fc - 1 else d
        bytes_accessed += G * 2 * prev_d * dcols
        prev_d = d

    return pl.pallas_call(
        kernel,
        out_shape=jax.ShapeDtypeStruct((G, B, ydim_pad), jnp.float32),
        grid=(G,),
        in_specs=in_specs,
        out_specs=out_specs,
        scratch_shapes=scratch_shapes,
        compiler_params=pltpu.CompilerParams(
            dimension_semantics=("parallel",)),          # batch-tile axis -> 2 TCs on v7x
        cost_estimate=pl.CostEstimate(
            flops=flops, transcendentals=0, bytes_accessed=bytes_accessed),
    )


# --------------------------------------------------------------------------
# Parameters (Kaiming-normal weights, zero biases — matches module.init_param)
# conv weight columns are ordered (dy, dx, cin): a torch Conv2d weight
# (Cout, Cin, kh, kw) maps via w.transpose(0, 2, 3, 1).reshape(Cout, -1).
# fc1 rows are in torch's NCHW-flatten order (c, h, w).
# --------------------------------------------------------------------------
def init_params(key, xdim, ksize, cdims, hdims, ydim):
    C0, H, W = xdim
    params = {"conv": [], "fc": []}
    prev_c = C0
    for cdim in cdims:
        key, k1 = jax.random.split(key)
        fan_in = prev_c * ksize * ksize
        w = ((2.0 / fan_in) ** 0.5) * jax.random.normal(
            k1, (cdim, ksize, ksize, prev_c), jnp.float32)
        params["conv"].append((w.reshape(cdim, ksize * ksize * prev_c),
                               jnp.zeros((cdim,), jnp.float32)))
        prev_c = cdim
    hf = H // (2 ** len(cdims))
    wf = W // (2 ** len(cdims))
    prev_d = prev_c * hf * wf
    for d in list(hdims) + [ydim]:
        key, k1 = jax.random.split(key)
        w = ((2.0 / prev_d) ** 0.5) * jax.random.normal(k1, (prev_d, d), jnp.float32)
        params["fc"].append((w, jnp.zeros((d,), jnp.float32)))
        prev_d = d
    return params


# --------------------------------------------------------------------------
# Forward pass (same op ordering as the nn.Sequential in the PyTorch module)
# --------------------------------------------------------------------------
def cnn_forward(x_nchw, params, xdim, ksize, cdims, hdims, ydim, b_tile=None):
    N = x_nchw.shape[0]
    C0, H, W = xdim
    if b_tile is None:
        # >= 2 grid steps so both v7x TensorCores get work; v5e/v6e still
        # amortize per-step overhead over b_tile samples.
        b_tile = N // 2 if (N >= 2 and N % 2 == 0) else N
    G = N // b_tile
    ydim_pad = _round_up(ydim, 128)
    call = _build_fused_cnn_call(N, b_tile, xdim, ksize, cdims, hdims, ydim)

    # Input as a lane-dense slab: (tiles, C0*b_tile, H*W), channel-major rows.
    x = (x_nchw.reshape(G, b_tile, C0, H * W)
               .transpose(0, 2, 1, 3)
               .reshape(G, C0 * b_tile, H * W))

    args = [x]
    eye_b = jnp.eye(b_tile, dtype=jnp.float32)
    hcur, wcur = H, W
    for (w, b) in params["conv"]:
        # block-diagonal expansion over the batch tile: rows (cout, b), cols (k, b)
        wbd = jnp.kron(w, eye_b).astype(jnp.bfloat16)
        bexp = jnp.repeat(b, b_tile).reshape(-1, 1).astype(jnp.float32)
        # 2x2/2 max-pool anchor-selection matrix (0/1)
        hh, wh = hcur // 2, wcur // 2
        ii, jj = jnp.meshgrid(jnp.arange(hh), jnp.arange(wh), indexing="ij")
        anchor = (2 * ii * wcur + 2 * jj).reshape(-1)
        sel = (jnp.arange(hcur * wcur)[:, None] == anchor[None, :]).astype(jnp.float32)
        args += [wbd, bexp, sel]
        hcur, wcur = hh, wh

    n_fc = len(hdims) + 1
    for li, (w, b) in enumerate(params["fc"]):
        if li == n_fc - 1:
            w = jnp.concatenate(
                [w, jnp.zeros((w.shape[0], ydim_pad - ydim), w.dtype)], axis=1)
            b = jnp.concatenate([b, jnp.zeros((ydim_pad - ydim,), b.dtype)])
        args += [w.astype(jnp.bfloat16), b.reshape(1, -1).astype(jnp.float32)]

    out = call(*args)                                    # (G, b_tile, ydim_pad)
    return out.reshape(N, ydim_pad)[:, :ydim]


if __name__ == "__main__":
    # Small config consistent with the module's constructor:
    #   xdim=[4,16,16], ksize=3, cdims=[8,16], hdims=[64,32], ydim=10
    # batch=4 with b_tile=2 -> grid of 2 batch tiles (both v7x cores get work).
    xdim = [4, 16, 16]
    ksize = 3
    cdims = [8, 16]
    hdims = [64, 32]
    ydim = 10
    batch = 4

    key = jax.random.PRNGKey(0)
    key, kx = jax.random.split(key)
    x = jax.random.normal(kx, (batch, xdim[0], xdim[1], xdim[2]), jnp.float32)

    params = init_params(key, xdim, ksize, cdims, hdims, ydim)

    out = cnn_forward(x, params, xdim, ksize, cdims, hdims, ydim)
    out = jax.block_until_ready(out)
    assert out.shape == (batch, ydim), out.shape
    print("KERNEL_OK")
</pallas_src>

<mosaic_0001>
module attributes {stable_mosaic.version = 11 : i64} {
  func.func @kernel(%arg0: i32, %arg1: memref<1x8x256xf32, #tpu.memory_space<vmem>>, %arg2: memref<16x72xbf16, #tpu.memory_space<vmem>>, %arg3: memref<16x1xf32, #tpu.memory_space<vmem>>, %arg4: memref<256x64xf32, #tpu.memory_space<vmem>>, %arg5: memref<32x144xbf16, #tpu.memory_space<vmem>>, %arg6: memref<32x1xf32, #tpu.memory_space<vmem>>, %arg7: memref<64x16xf32, #tpu.memory_space<vmem>>, %arg8: memref<256x64xbf16, #tpu.memory_space<vmem>>, %arg9: memref<1x64xf32, #tpu.memory_space<vmem>>, %arg10: memref<64x32xbf16, #tpu.memory_space<vmem>>, %arg11: memref<1x32xf32, #tpu.memory_space<vmem>>, %arg12: memref<32x128xbf16, #tpu.memory_space<vmem>>, %arg13: memref<1x128xf32, #tpu.memory_space<vmem>>, %arg14: memref<1x2x128xf32, #tpu.memory_space<vmem>>, %arg15: memref<8x384xf32, #tpu.memory_space<vmem>>, %arg16: memref<72x256xbf16, #tpu.memory_space<vmem>>, %arg17: memref<16x384xf32, #tpu.memory_space<vmem>>, %arg18: memref<16x128xf32, #tpu.memory_space<vmem>>, %arg19: memref<144x64xbf16, #tpu.memory_space<vmem>>, %arg20: memref<32x128xf32, #tpu.memory_space<vmem>>, %arg21: memref<32x16xf32, #tpu.memory_space<vmem>>) attributes {dimension_semantics = [#tpu.dimension_semantics<parallel>], iteration_bounds = array<i64: 2>, scalar_prefetch = 0 : i64, scratch_operands = 7 : i64, tpu.core_type = #tpu.core_type<tc>, window_params = [{transform_indices = @transform_0, window_bounds = array<i64: 1, 8, 256>}, {pipeline_mode = #tpu.pipeline_mode<synchronous>, transform_indices = @transform_1, window_bounds = array<i64: 16, 72>}, {pipeline_mode = #tpu.pipeline_mode<synchronous>, transform_indices = @transform_2, window_bounds = array<i64: 16, 1>}, {pipeline_mode = #tpu.pipeline_mode<synchronous>, transform_indices = @transform_3, window_bounds = array<i64: 256, 64>}, {pipeline_mode = #tpu.pipeline_mode<synchronous>, transform_indices = @transform_4, window_bounds = array<i64: 32, 144>}, {pipeline_mode = #tpu.pipeline_mode<synchronous>, transform_indices = @transform_5, window_bounds = array<i64: 32, 1>}, {pipeline_mode = #tpu.pipeline_mode<synchronous>, transform_indices = @transform_6, window_bounds = array<i64: 64, 16>}, {pipeline_mode = #tpu.pipeline_mode<synchronous>, transform_indices = @transform_7, window_bounds = array<i64: 256, 64>}, {pipeline_mode = #tpu.pipeline_mode<synchronous>, transform_indices = @transform_8, window_bounds = array<i64: 1, 64>}, {pipeline_mode = #tpu.pipeline_mode<synchronous>, transform_indices = @transform_9, window_bounds = array<i64: 64, 32>}, {pipeline_mode = #tpu.pipeline_mode<synchronous>, transform_indices = @transform_10, window_bounds = array<i64: 1, 32>}, {pipeline_mode = #tpu.pipeline_mode<synchronous>, transform_indices = @transform_11, window_bounds = array<i64: 32, 128>}, {pipeline_mode = #tpu.pipeline_mode<synchronous>, transform_indices = @transform_12, window_bounds = array<i64: 1, 128>}, {transform_indices = @transform_13, window_bounds = array<i64: 1, 2, 128>}]} {
    %c0 = arith.constant 0 : index
    %c0_0 = arith.constant 0 : index
    %c0_1 = arith.constant 0 : index
    %0 = vector.load %arg1[%c0, %c0_0, %c0_1] : memref<1x8x256xf32, #tpu.memory_space<vmem>>, vector<1x8x256xf32>
    %1 = vector.shape_cast %0 : vector<1x8x256xf32> to vector<8x256xf32>
    %cst = arith.constant 0.000000e+00 : f32
    %2 = vector.broadcast %cst : f32 to vector<8x17xf32>
    %c0_2 = arith.constant 0 : index
    %c0_3 = arith.constant 0 : index
    %3 = vector.load %arg15[%c0_2, %c0_3] : memref<8x384xf32, #tpu.memory_space<vmem>>, vector<8x17xf32>
    tpu.vector_store %arg15[%c0_2, %c0_3], %2 {strides = array<i32>} : memref<8x384xf32, #tpu.memory_space<vmem>>, vector<8x17xf32>,
    %cst_4 = arith.constant 0.000000e+00 : f32
    %4 = vector.broadcast %cst_4 : f32 to vector<8x111xf32>
    %c0_5 = arith.constant 0 : index
    %c273 = arith.constant 273 : index
    %5 = vector.load %arg15[%c0_5, %c273] : memref<8x384xf32, #tpu.memory_space<vmem>>, vector<8x111xf32>
    tpu.vector_store %arg15[%c0_5, %c273], %4 {strides = array<i32>} : memref<8x384xf32, #tpu.memory_space<vmem>>, vector<8x111xf32>,
    %c0_6 = arith.constant 0 : index
    %c17 = arith.constant 17 : index
    %6 = vector.load %arg15[%c0_6, %c17] : memref<8x384xf32, #tpu.memory_space<vmem>>, vector<8x256xf32>
    tpu.vector_store %arg15[%c0_6, %c17], %1 {strides = array<i32>} : memref<8x384xf32, #tpu.memory_space<vmem>>, vector<8x256xf32>,
    %7 = tpu.iota {dimensions = array<i32: 1>} : vector<1x256xi32>
    %c16_i32 = arith.constant 16 : i32
    %c0_i32 = arith.constant 0 : i32
    %8 = arith.cmpi eq, %c16_i32, %c0_i32 : i32
    %c1_i32 = arith.constant 1 : i32
    %9 = arith.select %8, %c1_i32, %c16_i32 : i32
    %10 = vector.broadcast %9 : i32 to vector<1x256xi32>
    %11 = arith.remsi %7, %10 : vector<1x256xi32>
    %c0_i32_7 = arith.constant 0 : i32
    %12 = vector.broadcast %c0_i32_7 : i32 to vector<1x256xi32>
    %13 = arith.cmpi ne, %11, %12 : vector<1x256xi32>
    %c0_i32_8 = arith.constant 0 : i32
    %14 = vector.broadcast %c0_i32_8 : i32 to vector<1x256xi32>
    %15 = arith.cmpi slt, %11, %14 : vector<1x256xi32>
    %c0_i32_9 = arith.constant 0 : i32
    %16 = arith.cmpi slt, %9, %c0_i32_9 : i32
    %17 = vector.broadcast %16 : i1 to vector<1x256xi1>
    %18 = vector.broadcast %17 : vector<1x256xi1> to vector<1x256xi1>
    %19 = arith.xori %15, %18 : vector<1x256xi1>
    %20 = arith.andi %19, %13 : vector<1x256xi1>
    %21 = vector.broadcast %9 : i32 to vector<1x256xi32>
    %22 = arith.addi %11, %21 : vector<1x256xi32>
    %23 = arith.select %20, %22, %11 : vector<1x256xi1>, vector<1x256xi32>
    %c0_10 = arith.constant 0 : index
    %c0_11 = arith.constant 0 : index
    %24 = vector.load %arg15[%c0_10, %c0_11] : memref<8x384xf32, #tpu.memory_space<vmem>>, vector<8x256xf32>
    %c-1_i32 = arith.constant -1 : i32
    %25 = vector.broadcast %c-1_i32 : i32 to vector<1x256xi32>
    %26 = arith.addi %23, %25 : vector<1x256xi32>
    %c0_i32_12 = arith.constant 0 : i32
    %27 = vector.broadcast %c0_i32_12 : i32 to vector<1x256xi32>
    %28 = arith.cmpi sge, %26, %27 : vector<1x256xi32>
    %c16_i32_13 = arith.constant 16 : i32
    %29 = vector.broadcast %c16_i32_13 : i32 to vector<1x256xi32>
    %30 = arith.cmpi slt, %26, %29 : vector<1x256xi32>
    %31 = arith.andi %28, %30 : vector<1x256xi1>
    %cst_14 = arith.constant 0.000000e+00 : f32
    %32 = vector.shape_cast %31 : vector<1x256xi1> to vector<1x256xi1>
    %33 = vector.broadcast %32 : vector<1x256xi1> to vector<8x256xi1>
    %34 = vector.broadcast %cst_14 : f32 to vector<8x256xf32>
    %35 = arith.select %33, %24, %34 : vector<8x256xi1>, vector<8x256xf32>
    %36 = arith.truncf %35 : vector<8x256xf32> to vector<8x256xbf16>
    %c0_15 = arith.constant 0 : index
    %c0_16 = arith.constant 0 : index
    %37 = vector.load %arg16[%c0_15, %c0_16] : memref<72x256xbf16, #tpu.memory_space<vmem>>, vector<8x256xbf16>
    tpu.vector_store %arg16[%c0_15, %c0_16], %36 {strides = array<i32>} : memref<72x256xbf16, #tpu.memory_space<vmem>>, vector<8x256xbf16>,
    %c0_17 = arith.constant 0 : index
    %c1 = arith.constant 1 : index
    %38 = vector.load %arg15[%c0_17, %c1] : memref<8x384xf32, #tpu.memory_space<vmem>>, vector<8x256xf32>
    %c0_i32_18 = arith.constant 0 : i32
    %39 = vector.broadcast %c0_i32_18 : i32 to vector<1x256xi32>
    %40 = arith.addi %23, %39 : vector<1x256xi32>
    %c0_i32_19 = arith.constant 0 : i32
    %41 = vector.broadcast %c0_i32_19 : i32 to vector<1x256xi32>
    %42 = arith.cmpi sge, %40, %41 : vector<1x256xi32>
    %c16_i32_20 = arith.constant 16 : i32
    %43 = vector.broadcast %c16_i32_20 : i32 to vector<1x256xi32>
    %44 = arith.cmpi slt, %40, %43 : vector<1x256xi32>
    %45 = arith.andi %42, %44 : vector<1x256xi1>
    %cst_21 = arith.constant 0.000000e+00 : f32
    %46 = vector.shape_cast %45 : vector<1x256xi1> to vector<1x256xi1>
    %47 = vector.broadcast %46 : vector<1x256xi1> to vector<8x256xi1>
    %48 = vector.broadcast %cst_21 : f32 to vector<8x256xf32>
    %49 = arith.select %47, %38, %48 : vector<8x256xi1>, vector<8x256xf32>
    %50 = arith.truncf %49 : vector<8x256xf32> to vector<8x256xbf16>
    %c8 = arith.constant 8 : index
    %c0_22 = arith.constant 0 : index
    %51 = vector.load %arg16[%c8, %c0_22] : memref<72x256xbf16, #tpu.memory_space<vmem>>, vector<8x256xbf16>
    tpu.vector_store %arg16[%c8, %c0_22], %50 {strides = array<i32>} : memref<72x256xbf16, #tpu.memory_space<vmem>>, vector<8x256xbf16>,
    %c0_23 = arith.constant 0 : index
    %c2 = arith.constant 2 : index
    %52 = vector.load %arg15[%c0_23, %c2] : memref<8x384xf32, #tpu.memory_space<vmem>>, vector<8x256xf32>
    %c1_i32_24 = arith.constant 1 : i32
    %53 = vector.broadcast %c1_i32_24 : i32 to vector<1x256xi32>
    %54 = arith.addi %23, %53 : vector<1x256xi32>
    %c0_i32_25 = arith.constant 0 : i32
    %55 = vector.broadcast %c0_i32_25 : i32 to vector<1x256xi32>
    %56 = arith.cmpi sge, %54, %55 : vector<1x256xi32>
    %c16_i32_26 = arith.constant 16 : i32
    %57 = vector.broadcast %c16_i32_26 : i32 to vector<1x256xi32>
    %58 = arith.cmpi slt, %54, %57 : vector<1x256xi32>
    %59 = arith.andi %56, %58 : vector<1x256xi1>
    %cst_27 = arith.constant 0.000000e+00 : f32
    %60 = vector.shape_cast %59 : vector<1x256xi1> to vector<1x256xi1>
    %61 = vector.broadcast %60 : vector<1x256xi1> to vector<8x256xi1>
    %62 = vector.broadcast %cst_27 : f32 to vector<8x256xf32>
    %63 = arith.select %61, %52, %62 : vector<8x256xi1>, vector<8x256xf32>
    %64 = arith.truncf %63 : vector<8x256xf32> to vector<8x256xbf16>
    %c16 = arith.constant 16 : index
    %c0_28 = arith.constant 0 : index
    %65 = vector.load %arg16[%c16, %c0_28] : memref<72x256xbf16, #tpu.memory_space<vmem>>, vector<8x256xbf16>
    tpu.vector_store %arg16[%c16, %c0_28], %64 {strides = array<i32>} : memref<72x256xbf16, #tpu.memory_space<vmem>>, vector<8x256xbf16>,
    %c0_29 = arith.constant 0 : index
    %c16_30 = arith.constant 16 : index
    %66 = vector.load %arg15[%c0_29, %c16_30] : memref<8x384xf32, #tpu.memory_space<vmem>>, vector<8x256xf32>
    %c-1_i32_31 = arith.constant -1 : i32
    %67 = vector.broadcast %c-1_i32_31 : i32 to vector<1x256xi32>
    %68 = arith.addi %23, %67 : vector<1x256xi32>
    %c0_i32_32 = arith.constant 0 : i32
    %69 = vector.broadcast %c0_i32_32 : i32 to vector<1x256xi32>
    %70 = arith.cmpi sge, %68, %69 : vector<1x256xi32>
    %c16_i32_33 = arith.constant 16 : i32
    %71 = vector.broadcast %c16_i32_33 : i32 to vector<1x256xi32>
    %72 = arith.cmpi slt, %68, %71 : vector<1x256xi32>
    %73 = arith.andi %70, %72 : vector<1x256xi1>
    %cst_34 = arith.constant 0.000000e+00 : f32
    %74 = vector.shape_cast %73 : vector<1x256xi1> to vector<1x256xi1>
    %75 = vector.broadcast %74 : vector<1x256xi1> to vector<8x256xi1>
    %76 = vector.broadcast %cst_34 : f32 to vector<8x256xf32>
    %77 = arith.select %75, %66, %76 : vector<8x256xi1>, vector<8x256xf32>
    %78 = arith.truncf %77 : vector<8x256xf32> to vector<8x256xbf16>
    %c24 = arith.constant 24 : index
    %c0_35 = arith.constant 0 : index
    %79 = vector.load %arg16[%c24, %c0_35] : memref<72x256xbf16, #tpu.memory_space<vmem>>, vector<8x256xbf16>
    tpu.vector_store %arg16[%c24, %c0_35], %78 {strides = array<i32>} : memref<72x256xbf16, #tpu.memory_space<vmem>>, vector<8x256xbf16>,
    %c0_36 = arith.constant 0 : index
    %c17_37 = arith.constant 17 : index
    %80 = vector.load %arg15[%c0_36, %c17_37] : memref<8x384xf32, #tpu.memory_space<vmem>>, vector<8x256xf32>
    %c0_i32_38 = arith.constant 0 : i32
    %81 = vector.broadcast %c0_i32_38 : i32 to vector<1x256xi32>
    %82 = arith.addi %23, %81 : vector<1x256xi32>
    %c0_i32_39 = arith.constant 0 : i32
    %83 = vector.broadcast %c0_i32_39 : i32 to vector<1x256xi32>
    %84 = arith.cmpi sge, %82, %83 : vector<1x256xi32>
    %c16_i32_40 = arith.constant 16 : i32
    %85 = vector.broadcast %c16_i32_40 : i32 to vector<1x256xi32>
    %86 = arith.cmpi slt, %82, %85 : vector<1x256xi32>
    %87 = arith.andi %84, %86 : vector<1x256xi1>
    %cst_41 = arith.constant 0.000000e+00 : f32
    %88 = vector.shape_cast %87 : vector<1x256xi1> to vector<1x256xi1>
    %89 = vector.broadcast %88 : vector<1x256xi1> to vector<8x256xi1>
    %90 = vector.broadcast %cst_41 : f32 to vector<8x256xf32>
    %91 = arith.select %89, %80, %90 : vector<8x256xi1>, vector<8x256xf32>
    %92 = arith.truncf %91 : vector<8x256xf32> to vector<8x256xbf16>
    %c32 = arith.constant 32 : index
    %c0_42 = arith.constant 0 : index
    %93 = vector.load %arg16[%c32, %c0_42] : memref<72x256xbf16, #tpu.memory_space<vmem>>, vector<8x256xbf16>
    tpu.vector_store %arg16[%c32, %c0_42], %92 {strides = array<i32>} : memref<72x256xbf16, #tpu.memory_space<vmem>>, vector<8x256xbf16>,
    %c0_43 = arith.constant 0 : index
    %c18 = arith.constant 18 : index
    %94 = vector.load %arg15[%c0_43, %c18] : memref<8x384xf32, #tpu.memory_space<vmem>>, vector<8x256xf32>
    %c1_i32_44 = arith.constant 1 : i32
    %95 = vector.broadcast %c1_i32_44 : i32 to vector<1x256xi32>
    %96 = arith.addi %23, %95 : vector<1x256xi32>
    %c0_i32_45 = arith.constant 0 : i32
    %97 = vector.broadcast %c0_i32_45 : i32 to vector<1x256xi32>
    %98 = arith.cmpi sge, %96, %97 : vector<1x256xi32>
    %c16_i32_46 = arith.constant 16 : i32
    %99 = vector.broadcast %c16_i32_46 : i32 to vector<1x256xi32>
    %100 = arith.cmpi slt, %96, %99 : vector<1x256xi32>
    %101 = arith.andi %98, %100 : vector<1x256xi1>
    %cst_47 = arith.constant 0.000000e+00 : f32
    %102 = vector.shape_cast %101 : vector<1x256xi1> to vector<1x256xi1>
    %103 = vector.broadcast %102 : vector<1x256xi1> to vector<8x256xi1>
    %104 = vector.broadcast %cst_47 : f32 to vector<8x256xf32>
    %105 = arith.select %103, %94, %104 : vector<8x256xi1>, vector<8x256xf32>
    %106 = arith.truncf %105 : vector<8x256xf32> to vector<8x256xbf16>
    %c40 = arith.constant 40 : index
    %c0_48 = arith.constant 0 : index
    %107 = vector.load %arg16[%c40, %c0_48] : memref<72x256xbf16, #tpu.memory_space<vmem>>, vector<8x256xbf16>
    tpu.vector_store %arg16[%c40, %c0_48], %106 {strides = array<i32>} : memref<72x256xbf16, #tpu.memory_space<vmem>>, vector<8x256xbf16>,
    %c0_49 = arith.constant 0 : index
    %c32_50 = arith.constant 32 : index
    %108 = vector.load %arg15[%c0_49, %c32_50] : memref<8x384xf32, #tpu.memory_space<vmem>>, vector<8x256xf32>
    %c-1_i32_51 = arith.constant -1 : i32
    %109 = vector.broadcast %c-1_i32_51 : i32 to vector<1x256xi32>
    %110 = arith.addi %23, %109 : vector<1x256xi32>
    %c0_i32_52 = arith.constant 0 : i32
    %111 = vector.broadcast %c0_i32_52 : i32 to vector<1x256xi32>
    %112 = arith.cmpi sge, %110, %111 : vector<1x256xi32>
    %c16_i32_53 = arith.constant 16 : i32
    %113 = vector.broadcast %c16_i32_53 : i32 to vector<1x256xi32>
    %114 = arith.cmpi slt, %110, %113 : vector<1x256xi32>
    %115 = arith.andi %112, %114 : vector<1x256xi1>
    %cst_54 = arith.constant 0.000000e+00 : f32
    %116 = vector.shape_cast %115 : vector<1x256xi1> to vector<1x256xi1>
    %117 = vector.broadcast %116 : vector<1x256xi1> to vector<8x256xi1>
    %118 = vector.broadcast %cst_54 : f32 to vector<8x256xf32>
    %119 = arith.select %117, %108, %118 : vector<8x256xi1>, vector<8x256xf32>
    %120 = arith.truncf %119 : vector<8x256xf32> to vector<8x256xbf16>
    %c48 = arith.constant 48 : index
    %c0_55 = arith.constant 0 : index
    %121 = vector.load %arg16[%c48, %c0_55] : memref<72x256xbf16, #tpu.memory_space<vmem>>, vector<8x256xbf16>
    tpu.vector_store %arg16[%c48, %c0_55], %120 {strides = array<i32>} : memref<72x256xbf16, #tpu.memory_space<vmem>>, vector<8x256xbf16>,
    %c0_56 = arith.constant 0 : index
    %c33 = arith.constant 33 : index
    %122 = vector.load %arg15[%c0_56, %c33] : memref<8x384xf32, #tpu.memory_space<vmem>>, vector<8x256xf32>
    %c0_i32_57 = arith.constant 0 : i32
    %123 = vector.broadcast %c0_i32_57 : i32 to vector<1x256xi32>
    %124 = arith.addi %23, %123 : vector<1x256xi32>
    %c0_i32_58 = arith.constant 0 : i32
    %125 = vector.broadcast %c0_i32_58 : i32 to vector<1x256xi32>
    %126 = arith.cmpi sge, %124, %125 : vector<1x256xi32>
    %c16_i32_59 = arith.constant 16 : i32
    %127 = vector.broadcast %c16_i32_59 : i32 to vector<1x256xi32>
    %128 = arith.cmpi slt, %124, %127 : vector<1x256xi32>
    %129 = arith.andi %126, %128 : vector<1x256xi1>
    %cst_60 = arith.constant 0.000000e+00 : f32
    %130 = vector.shape_cast %129 : vector<1x256xi1> to vector<1x256xi1>
    %131 = vector.broadcast %130 : vector<1x256xi1> to vector<8x256xi1>
    %132 = vector.broadcast %cst_60 : f32 to vector<8x256xf32>
    %133 = arith.select %131, %122, %132 : vector<8x256xi1>, vector<8x256xf32>
    %134 = arith.truncf %133 : vector<8x256xf32> to vector<8x256xbf16>
    %c56 = arith.constant 56 : index
    %c0_61 = arith.constant 0 : index
    %135 = vector.load %arg16[%c56, %c0_61] : memref<72x256xbf16, #tpu.memory_space<vmem>>, vector<8x256xbf16>
    tpu.vector_store %arg16[%c56, %c0_61], %134 {strides = array<i32>} : memref<72x256xbf16, #tpu.memory_space<vmem>>, vector<8x256xbf16>,
    %c0_62 = arith.constant 0 : index
    %c34 = arith.constant 34 : index
    %136 = vector.load %arg15[%c0_62, %c34] : memref<8x384xf32, #tpu.memory_space<vmem>>, vector<8x256xf32>
    %c1_i32_63 = arith.constant 1 : i32
    %137 = vector.broadcast %c1_i32_63 : i32 to vector<1x256xi32>
    %138 = arith.addi %23, %137 : vector<1x256xi32>
    %c0_i32_64 = arith.constant 0 : i32
    %139 = vector.broadcast %c0_i32_64 : i32 to vector<1x256xi32>
    %140 = arith.cmpi sge, %138, %139 : vector<1x256xi32>
    %c16_i32_65 = arith.constant 16 : i32
    %141 = vector.broadcast %c16_i32_65 : i32 to vector<1x256xi32>
    %142 = arith.cmpi slt, %138, %141 : vector<1x256xi32>
    %143 = arith.andi %140, %142 : vector<1x256xi1>
    %cst_66 = arith.constant 0.000000e+00 : f32
    %144 = vector.shape_cast %143 : vector<1x256xi1> to vector<1x256xi1>
    %145 = vector.broadcast %144 : vector<1x256xi1> to vector<8x256xi1>
    %146 = vector.broadcast %cst_66 : f32 to vector<8x256xf32>
    %147 = arith.select %145, %136, %146 : vector<8x256xi1>, vector<8x256xf32>
    %148 = arith.truncf %147 : vector<8x256xf32> to vector<8x256xbf16>
    %c64 = arith.constant 64 : index
    %c0_67 = arith.constant 0 : index
    %149 = vector.load %arg16[%c64, %c0_67] : memref<72x256xbf16, #tpu.memory_space<vmem>>, vector<8x256xbf16>
    tpu.vector_store %arg16[%c64, %c0_67], %148 {strides = array<i32>} : memref<72x256xbf16, #tpu.memory_space<vmem>>, vector<8x256xbf16>,
    %c0_68 = arith.constant 0 : index
    %c0_69 = arith.constant 0 : index
    %150 = vector.load %arg2[%c0_68, %c0_69] : memref<16x72xbf16, #tpu.memory_space<vmem>>, vector<16x72xbf16>
    %c0_70 = arith.constant 0 : index
    %c0_71 = arith.constant 0 : index
    %151 = vector.load %arg16[%c0_70, %c0_71] : memref<72x256xbf16, #tpu.memory_space<vmem>>, vector<72x256xbf16>
    %cst_72 = arith.constant dense<0.000000e+00> : vector<16x256xf32>
    %152 = tpu.matmul %150, %151, %cst_72 {dimension_numbers = #tpu.dot_dimension_numbers<[1], [0], [0], [1], [0, 0, 1, 1], [], []>} : vector<16x72xbf16>, vector<72x256xbf16>, vector<16x256xf32> -> vector<16x256xf32>
    %c0_73 = arith.constant 0 : index
    %c0_74 = arith.constant 0 : index
    %153 = vector.load %arg3[%c0_73, %c0_74] : memref<16x1xf32, #tpu.memory_space<vmem>>, vector<16x1xf32>
    %154 = vector.broadcast %153 : vector<16x1xf32> to vector<16x256xf32>
    %155 = arith.addf %152, %154 : vector<16x256xf32>
    %cst_75 = arith.constant 0.000000e+00 : f32
    %156 = vector.broadcast %cst_75 : f32 to vector<16x256xf32>
    %157 = arith.maximumf %155, %156 : vector<16x256xf32>
    %cst_76 = arith.constant 0.000000e+00 : f32
    %158 = vector.broadcast %cst_76 : f32 to vector<16x128xf32>
    %c0_77 = arith.constant 0 : index
    %c256 = arith.constant 256 : index
    %159 = vector.load %arg17[%c0_77, %c256] : memref<16x384xf32, #tpu.memory_space<vmem>>, vector<16x128xf32>
    tpu.vector_store %arg17[%c0_77, %c256], %158 {strides = array<i32>} : memref<16x384xf32, #tpu.memory_space<vmem>>, vector<16x128xf32>,
    %c0_78 = arith.constant 0 : index
    %c0_79 = arith.constant 0 : index
    %160 = vector.load %arg17[%c0_78, %c0_79] : memref<16x384xf32, #tpu.memory_space<vmem>>, vector<16x256xf32>
    tpu.vector_store %arg17[%c0_78, %c0_79], %157 {strides = array<i32>} : memref<16x384xf32, #tpu.memory_space<vmem>>, vector<16x256xf32>,
    %c0_80 = arith.constant 0 : index
    %c1_81 = arith.constant 1 : index
    %161 = vector.load %arg17[%c0_80, %c1_81] : memref<16x384xf32, #tpu.memory_space<vmem>>, vector<16x256xf32>
    %162 = arith.maximumf %157, %161 : vector<16x256xf32>
    %c0_82 = arith.constant 0 : index
    %c16_83 = arith.constant 16 : index
    %163 = vector.load %arg17[%c0_82, %c16_83] : memref<16x384xf32, #tpu.memory_space<vmem>>, vector<16x256xf32>
    %c0_84 = arith.constant 0 : index
    %c17_85 = arith.constant 17 : index
    %164 = vector.load %arg17[%c0_84, %c17_85] : memref<16x384xf32, #tpu.memory_space<vmem>>, vector<16x256xf32>
    %165 = arith.maximumf %163, %164 : vector<16x256xf32>
    %166 = arith.maximumf %162, %165 : vector<16x256xf32>
    %c0_86 = arith.constant 0 : index
    %c0_87 = arith.constant 0 : index
    %167 = vector.load %arg4[%c0_86, %c0_87] : memref<256x64xf32, #tpu.memory_space<vmem>>, vector<256x64xf32>
    %cst_88 = arith.constant dense<0.000000e+00> : vector<16x64xf32>
    %168 = tpu.matmul %166, %167, %cst_88 {dimension_numbers = #tpu.dot_dimension_numbers<[1], [0], [0], [1], [0, 0, 1, 1], [], []>} : vector<16x256xf32>, vector<256x64xf32>, vector<16x64xf32> -> vector<16x64xf32>
    %cst_89 = arith.constant 0.000000e+00 : f32
    %169 = vector.broadcast %cst_89 : f32 to vector<16x9xf32>
    %c0_90 = arith.constant 0 : index
    %c0_91 = arith.constant 0 : index
    %170 = vector.load %arg18[%c0_90, %c0_91] : memref<16x128xf32, #tpu.memory_space<vmem>>, vector<16x9xf32>
    tpu.vector_store %arg18[%c0_90, %c0_91], %169 {strides = array<i32>} : memref<16x128xf32, #tpu.memory_space<vmem>>, vector<16x9xf32>,
    %cst_92 = arith.constant 0.000000e+00 : f32
    %171 = vector.broadcast %cst_92 : f32 to vector<16x55xf32>
    %c0_93 = arith.constant 0 : index
    %c73 = arith.constant 73 : index
    %172 = vector.load %arg18[%c0_93, %c73] : memref<16x128xf32, #tpu.memory_space<vmem>>, vector<16x55xf32>
    tpu.vector_store %arg18[%c0_93, %c73], %171 {strides = array<i32>} : memref<16x128xf32, #tpu.memory_space<vmem>>, vector<16x55xf32>,
    %c0_94 = arith.constant 0 : index
    %c9 = arith.constant 9 : index
    %173 = vector.load %arg18[%c0_94, %c9] : memref<16x128xf32, #tpu.memory_space<vmem>>, vector<16x64xf32>
    tpu.vector_store %arg18[%c0_94, %c9], %168 {strides = array<i32>} : memref<16x128xf32, #tpu.memory_space<vmem>>, vector<16x64xf32>,
    %174 = tpu.iota {dimensions = array<i32: 1>} : vector<1x64xi32>
    %c8_i32 = arith.constant 8 : i32
    %c0_i32_95 = arith.constant 0 : i32
    %175 = arith.cmpi eq, %c8_i32, %c0_i32_95 : i32
    %c1_i32_96 = arith.constant 1 : i32
    %176 = arith.select %175, %c1_i32_96, %c8_i32 : i32
    %177 = vector.broadcast %176 : i32 to vector<1x64xi32>
    %178 = arith.remsi %174, %177 : vector<1x64xi32>
    %c0_i32_97 = arith.constant 0 : i32
    %179 = vector.broadcast %c0_i32_97 : i32 to vector<1x64xi32>
    %180 = arith.cmpi ne, %178, %179 : vector<1x64xi32>
    %c0_i32_98 = arith.constant 0 : i32
    %181 = vector.broadcast %c0_i32_98 : i32 to vector<1x64xi32>
    %182 = arith.cmpi slt, %178, %181 : vector<1x64xi32>
    %c0_i32_99 = arith.constant 0 : i32
    %183 = arith.cmpi slt, %176, %c0_i32_99 : i32
    %184 = vector.broadcast %183 : i1 to vector<1x64xi1>
    %185 = vector.broadcast %184 : vector<1x64xi1> to vector<1x64xi1>
    %186 = arith.xori %182, %185 : vector<1x64xi1>
    %187 = arith.andi %186, %180 : vector<1x64xi1>
    %188 = vector.broadcast %176 : i32 to vector<1x64xi32>
    %189 = arith.addi %178, %188 : vector<1x64xi32>
    %190 = arith.select %187, %189, %178 : vector<1x64xi1>, vector<1x64xi32>
    %c0_100 = arith.constant 0 : index
    %c0_101 = arith.constant 0 : index
    %191 = vector.load %arg18[%c0_100, %c0_101] : memref<16x128xf32, #tpu.memory_space<vmem>>, vector<16x64xf32>
    %c-1_i32_102 = arith.constant -1 : i32
    %192 = vector.broadcast %c-1_i32_102 : i32 to vector<1x64xi32>
    %193 = arith.addi %190, %192 : vector<1x64xi32>
    %c0_i32_103 = arith.constant 0 : i32
    %194 = vector.broadcast %c0_i32_103 : i32 to vector<1x64xi32>
    %195 = arith.cmpi sge, %193, %194 : vector<1x64xi32>
    %c8_i32_104 = arith.constant 8 : i32
    %196 = vector.broadcast %c8_i32_104 : i32 to vector<1x64xi32>
    %197 = arith.cmpi slt, %193, %196 : vector<1x64xi32>
    %198 = arith.andi %195, %197 : vector<1x64xi1>
    %cst_105 = arith.constant 0.000000e+00 : f32
    %199 = vector.shape_cast %198 : vector<1x64xi1> to vector<1x64xi1>
    %200 = vector.broadcast %199 : vector<1x64xi1> to vector<16x64xi1>
    %201 = vector.broadcast %cst_105 : f32 to vector<16x64xf32>
    %202 = arith.select %200, %191, %201 : vector<16x64xi1>, vector<16x64xf32>
    %203 = arith.truncf %202 : vector<16x64xf32> to vector<16x64xbf16>
    %c0_106 = arith.constant 0 : index
    %c0_107 = arith.constant 0 : index
    %204 = vector.load %arg19[%c0_106, %c0_107] : memref<144x64xbf16, #tpu.memory_space<vmem>>, vector<16x64xbf16>
    tpu.vector_store %arg19[%c0_106, %c0_107], %203 {strides = array<i32>} : memref<144x64xbf16, #tpu.memory_space<vmem>>, vector<16x64xbf16>,
    %c0_108 = arith.constant 0 : index
    %c1_109 = arith.constant 1 : index
    %205 = vector.load %arg18[%c0_108, %c1_109] : memref<16x128xf32, #tpu.memory_space<vmem>>, vector<16x64xf32>
    %c0_i32_110 = arith.constant 0 : i32
    %206 = vector.broadcast %c0_i32_110 : i32 to vector<1x64xi32>
    %207 = arith.addi %190, %206 : vector<1x64xi32>
    %c0_i32_111 = arith.constant 0 : i32
    %208 = vector.broadcast %c0_i32_111 : i32 to vector<1x64xi32>
    %209 = arith.cmpi sge, %207, %208 : vector<1x64xi32>
    %c8_i32_112 = arith.constant 8 : i32
    %210 = vector.broadcast %c8_i32_112 : i32 to vector<1x64xi32>
    %211 = arith.cmpi slt, %207, %210 : vector<1x64xi32>
    %212 = arith.andi %209, %211 : vector<1x64xi1>
    %cst_113 = arith.constant 0.000000e+00 : f32
    %213 = vector.shape_cast %212 : vector<1x64xi1> to vector<1x64xi1>
    %214 = vector.broadcast %213 : vector<1x64xi1> to vector<16x64xi1>
    %215 = vector.broadcast %cst_113 : f32 to vector<16x64xf32>
    %216 = arith.select %214, %205, %215 : vector<16x64xi1>, vector<16x64xf32>
    %217 = arith.truncf %216 : vector<16x64xf32> to vector<16x64xbf16>
    %c16_114 = arith.constant 16 : index
    %c0_115 = arith.constant 0 : index
    %218 = vector.load %arg19[%c16_114, %c0_115] : memref<144x64xbf16, #tpu.memory_space<vmem>>, vector<16x64xbf16>
    tpu.vector_store %arg19[%c16_114, %c0_115], %217 {strides = array<i32>} : memref<144x64xbf16, #tpu.memory_space<vmem>>, vector<16x64xbf16>,
    %c0_116 = arith.constant 0 : index
    %c2_117 = arith.constant 2 : index
    %219 = vector.load %arg18[%c0_116, %c2_117] : memref<16x128xf32, #tpu.memory_space<vmem>>, vector<16x64xf32>
    %c1_i32_118 = arith.constant 1 : i32
    %220 = vector.broadcast %c1_i32_118 : i32 to vector<1x64xi32>
    %221 = arith.addi %190, %220 : vector<1x64xi32>
    %c0_i32_119 = arith.constant 0 : i32
    %222 = vector.broadcast %c0_i32_119 : i32 to vector<1x64xi32>
    %223 = arith.cmpi sge, %221, %222 : vector<1x64xi32>
    %c8_i32_120 = arith.constant 8 : i32
    %224 = vector.broadcast %c8_i32_120 : i32 to vector<1x64xi32>
    %225 = arith.cmpi slt, %221, %224 : vector<1x64xi32>
    %226 = arith.andi %223, %225 : vector<1x64xi1>
    %cst_121 = arith.constant 0.000000e+00 : f32
    %227 = vector.shape_cast %226 : vector<1x64xi1> to vector<1x64xi1>
    %228 = vector.broadcast %227 : vector<1x64xi1> to vector<16x64xi1>
    %229 = vector.broadcast %cst_121 : f32 to vector<16x64xf32>
    %230 = arith.select %228, %219, %229 : vector<16x64xi1>, vector<16x64xf32>
    %231 = arith.truncf %230 : vector<16x64xf32> to vector<16x64xbf16>
    %c32_122 = arith.constant 32 : index
    %c0_123 = arith.constant 0 : index
    %232 = vector.load %arg19[%c32_122, %c0_123] : memref<144x64xbf16, #tpu.memory_space<vmem>>, vector<16x64xbf16>
    tpu.vector_store %arg19[%c32_122, %c0_123], %231 {strides = array<i32>} : memref<144x64xbf16, #tpu.memory_space<vmem>>, vector<16x64xbf16>,
    %c0_124 = arith.constant 0 : index
    %c8_125 = arith.constant 8 : index
    %233 = vector.load %arg18[%c0_124, %c8_125] : memref<16x128xf32, #tpu.memory_space<vmem>>, vector<16x64xf32>
    %c-1_i32_126 = arith.constant -1 : i32
    %234 = vector.broadcast %c-1_i32_126 : i32 to vector<1x64xi32>
    %235 = arith.addi %190, %234 : vector<1x64xi32>
    %c0_i32_127 = arith.constant 0 : i32
    %236 = vector.broadcast %c0_i32_127 : i32 to vector<1x64xi32>
    %237 = arith.cmpi sge, %235, %236 : vector<1x64xi32>
    %c8_i32_128 = arith.constant 8 : i32
    %238 = vector.broadcast %c8_i32_128 : i32 to vector<1x64xi32>
    %239 = arith.cmpi slt, %235, %238 : vector<1x64xi32>
    %240 = arith.andi %237, %239 : vector<1x64xi1>
    %cst_129 = arith.constant 0.000000e+00 : f32
    %241 = vector.shape_cast %240 : vector<1x64xi1> to vector<1x64xi1>
    %242 = vector.broadcast %241 : vector<1x64xi1> to vector<16x64xi1>
    %243 = vector.broadcast %cst_129 : f32 to vector<16x64xf32>
    %244 = arith.select %242, %233, %243 : vector<16x64xi1>, vector<16x64xf32>
    %245 = arith.truncf %244 : vector<16x64xf32> to vector<16x64xbf16>
    %c48_130 = arith.constant 48 : index
    %c0_131 = arith.constant 0 : index
    %246 = vector.load %arg19[%c48_130, %c0_131] : memref<144x64xbf16, #tpu.memory_space<vmem>>, vector<16x64xbf16>
    tpu.vector_store %arg19[%c48_130, %c0_131], %245 {strides = array<i32>} : memref<144x64xbf16, #tpu.memory_space<vmem>>, vector<16x64xbf16>,
    %c0_132 = arith.constant 0 : index
    %c9_133 = arith.constant 9 : index
    %247 = vector.load %arg18[%c0_132, %c9_133] : memref<16x128xf32, #tpu.memory_space<vmem>>, vector<16x64xf32>
    %c0_i32_134 = arith.constant 0 : i32
    %248 = vector.broadcast %c0_i32_134 : i32 to vector<1x64xi32>
    %249 = arith.addi %190, %248 : vector<1x64xi32>
    %c0_i32_135 = arith.constant 0 : i32
    %250 = vector.broadcast %c0_i32_135 : i32 to vector<1x64xi32>
    %251 = arith.cmpi sge, %249, %250 : vector<1x64xi32>
    %c8_i32_136 = arith.constant 8 : i32
    %252 = vector.broadcast %c8_i32_136 : i32 to vector<1x64xi32>
    %253 = arith.cmpi slt, %249, %252 : vector<1x64xi32>
    %254 = arith.andi %251, %253 : vector<1x64xi1>
    %cst_137 = arith.constant 0.000000e+00 : f32
    %255 = vector.shape_cast %254 : vector<1x64xi1> to vector<1x64xi1>
    %256 = vector.broadcast %255 : vector<1x64xi1> to vector<16x64xi1>
    %257 = vector.broadcast %cst_137 : f32 to vector<16x64xf32>
    %258 = arith.select %256, %247, %257 : vector<16x64xi1>, vector<16x64xf32>
    %259 = arith.truncf %258 : vector<16x64xf32> to vector<16x64xbf16>
    %c64_138 = arith.constant 64 : index
    %c0_139 = arith.constant 0 : index
    %260 = vector.load %arg19[%c64_138, %c0_139] : memref<144x64xbf16, #tpu.memory_space<vmem>>, vector<16x64xbf16>
    tpu.vector_store %arg19[%c64_138, %c0_139], %259 {strides = array<i32>} : memref<144x64xbf16, #tpu.memory_space<vmem>>, vector<16x64xbf16>,
    %c0_140 = arith.constant 0 : index
    %c10 = arith.constant 10 : index
    %261 = vector.load %arg18[%c0_140, %c10] : memref<16x128xf32, #tpu.memory_space<vmem>>, vector<16x64xf32>
    %c1_i32_141 = arith.constant 1 : i32
    %262 = vector.broadcast %c1_i32_141 : i32 to vector<1x64xi32>
    %263 = arith.addi %190, %262 : vector<1x64xi32>
    %c0_i32_142 = arith.constant 0 : i32
    %264 = vector.broadcast %c0_i32_142 : i32 to vector<1x64xi32>
    %265 = arith.cmpi sge, %263, %264 : vector<1x64xi32>
    %c8_i32_143 = arith.constant 8 : i32
    %266 = vector.broadcast %c8_i32_143 : i32 to vector<1x64xi32>
    %267 = arith.cmpi slt, %263, %266 : vector<1x64xi32>
    %268 = arith.andi %265, %267 : vector<1x64xi1>
    %cst_144 = arith.constant 0.000000e+00 : f32
    %269 = vector.shape_cast %268 : vector<1x64xi1> to vector<1x64xi1>
    %270 = vector.broadcast %269 : vector<1x64xi1> to vector<16x64xi1>
    %271 = vector.broadcast %cst_144 : f32 to vector<16x64xf32>
    %272 = arith.select %270, %261, %271 : vector<16x64xi1>, vector<16x64xf32>
    %273 = arith.truncf %272 : vector<16x64xf32> to vector<16x64xbf16>
    %c80 = arith.constant 80 : index
    %c0_145 = arith.constant 0 : index
    %274 = vector.load %arg19[%c80, %c0_145] : memref<144x64xbf16, #tpu.memory_space<vmem>>, vector<16x64xbf16>
    tpu.vector_store %arg19[%c80, %c0_145], %273 {strides = array<i32>} : memref<144x64xbf16, #tpu.memory_space<vmem>>, vector<16x64xbf16>,
    %c0_146 = arith.constant 0 : index
    %c16_147 = arith.constant 16 : index
    %275 = vector.load %arg18[%c0_146, %c16_147] : memref<16x128xf32, #tpu.memory_space<vmem>>, vector<16x64xf32>
    %c-1_i32_148 = arith.constant -1 : i32
    %276 = vector.broadcast %c-1_i32_148 : i32 to vector<1x64xi32>
    %277 = arith.addi %190, %276 : vector<1x64xi32>
    %c0_i32_149 = arith.constant 0 : i32
    %278 = vector.broadcast %c0_i32_149 : i32 to vector<1x64xi32>
    %279 = arith.cmpi sge, %277, %278 : vector<1x64xi32>
    %c8_i32_150 = arith.constant 8 : i32
    %280 = vector.broadcast %c8_i32_150 : i32 to vector<1x64xi32>
    %281 = arith.cmpi slt, %277, %280 : vector<1x64xi32>
    %282 = arith.andi %279, %281 : vector<1x64xi1>
    %cst_151 = arith.constant 0.000000e+00 : f32
    %283 = vector.shape_cast %282 : vector<1x64xi1> to vector<1x64xi1>
    %284 = vector.broadcast %283 : vector<1x64xi1> to vector<16x64xi1>
    %285 = vector.broadcast %cst_151 : f32 to vector<16x64xf32>
    %286 = arith.select %284, %275, %285 : vector<16x64xi1>, vector<16x64xf32>
    %287 = arith.truncf %286 : vector<16x64xf32> to vector<16x64xbf16>
    %c96 = arith.constant 96 : index
    %c0_152 = arith.constant 0 : index
    %288 = vector.load %arg19[%c96, %c0_152] : memref<144x64xbf16, #tpu.memory_space<vmem>>, vector<16x64xbf16>
    tpu.vector_store %arg19[%c96, %c0_152], %287 {strides = array<i32>} : memref<144x64xbf16, #tpu.memory_space<vmem>>, vector<16x64xbf16>,
    %c0_153 = arith.constant 0 : index
    %c17_154 = arith.constant 17 : index
    %289 = vector.load %arg18[%c0_153, %c17_154] : memref<16x128xf32, #tpu.memory_space<vmem>>, vector<16x64xf32>
    %c0_i32_155 = arith.constant 0 : i32
    %290 = vector.broadcast %c0_i32_155 : i32 to vector<1x64xi32>
    %291 = arith.addi %190, %290 : vector<1x64xi32>
    %c0_i32_156 = arith.constant 0 : i32
    %292 = vector.broadcast %c0_i32_156 : i32 to vector<1x64xi32>
    %293 = arith.cmpi sge, %291, %292 : vector<1x64xi32>
    %c8_i32_157 = arith.constant 8 : i32
    %294 = vector.broadcast %c8_i32_157 : i32 to vector<1x64xi32>
    %295 = arith.cmpi slt, %291, %294 : vector<1x64xi32>
    %296 = arith.andi %293, %295 : vector<1x64xi1>
    %cst_158 = arith.constant 0.000000e+00 : f32
    %297 = vector.shape_cast %296 : vector<1x64xi1> to vector<1x64xi1>
    %298 = vector.broadcast %297 : vector<1x64xi1> to vector<16x64xi1>
    %299 = vector.broadcast %cst_158 : f32 to vector<16x64xf32>
    %300 = arith.select %298, %289, %299 : vector<16x64xi1>, vector<16x64xf32>
    %301 = arith.truncf %300 : vector<16x64xf32> to vector<16x64xbf16>
    %c112 = arith.constant 112 : index
    %c0_159 = arith.constant 0 : index
    %302 = vector.load %arg19[%c112, %c0_159] : memref<144x64xbf16, #tpu.memory_space<vmem>>, vector<16x64xbf16>
    tpu.vector_store %arg19[%c112, %c0_159], %301 {strides = array<i32>} : memref<144x64xbf16, #tpu.memory_space<vmem>>, vector<16x64xbf16>,
    %c0_160 = arith.constant 0 : index
    %c18_161 = arith.constant 18 : index
    %303 = vector.load %arg18[%c0_160, %c18_161] : memref<16x128xf32, #tpu.memory_space<vmem>>, vector<16x64xf32>
    %c1_i32_162 = arith.constant 1 : i32
    %304 = vector.broadcast %c1_i32_162 : i32 to vector<1x64xi32>
    %305 = arith.addi %190, %304 : vector<1x64xi32>
    %c0_i32_163 = arith.constant 0 : i32
    %306 = vector.broadcast %c0_i32_163 : i32 to vector<1x64xi32>
    %307 = arith.cmpi sge, %305, %306 : vector<1x64xi32>
    %c8_i32_164 = arith.constant 8 : i32
    %308 = vector.broadcast %c8_i32_164 : i32 to vector<1x64xi32>
    %309 = arith.cmpi slt, %305, %308 : vector<1x64xi32>
    %310 = arith.andi %307, %309 : vector<1x64xi1>
    %cst_165 = arith.constant 0.000000e+00 : f32
    %311 = vector.shape_cast %310 : vector<1x64xi1> to vector<1x64xi1>
    %312 = vector.broadcast %311 : vector<1x64xi1> to vector<16x64xi1>
    %313 = vector.broadcast %cst_165 : f32 to vector<16x64xf32>
    %314 = arith.select %312, %303, %313 : vector<16x64xi1>, vector<16x64xf32>
    %315 = arith.truncf %314 : vector<16x64xf32> to vector<16x64xbf16>
    %c128 = arith.constant 128 : index
    %c0_166 = arith.constant 0 : index
    %316 = vector.load %arg19[%c128, %c0_166] : memref<144x64xbf16, #tpu.memory_space<vmem>>, vector<16x64xbf16>
    tpu.vector_store %arg19[%c128, %c0_166], %315 {strides = array<i32>} : memref<144x64xbf16, #tpu.memory_space<vmem>>, vector<16x64xbf16>,
    %c0_167 = arith.constant 0 : index
    %c0_168 = arith.constant 0 : index
    %317 = vector.load %arg5[%c0_167, %c0_168] : memref<32x144xbf16, #tpu.memory_space<vmem>>, vector<32x144xbf16>
    %c0_169 = arith.constant 0 : index
    %c0_170 = arith.constant 0 : index
    %318 = vector.load %arg19[%c0_169, %c0_170] : memref<144x64xbf16, #tpu.memory_space<vmem>>, vector<144x64xbf16>
    %cst_171 = arith.constant dense<0.000000e+00> : vector<32x64xf32>
    %319 = tpu.matmul %317, %318, %cst_171 {dimension_numbers = #tpu.dot_dimension_numbers<[1], [0], [0], [1], [0, 0, 1, 1], [], []>} : vector<32x144xbf16>, vector<144x64xbf16>, vector<32x64xf32> -> vector<32x64xf32>
    %c0_172 = arith.constant 0 : index
    %c0_173 = arith.constant 0 : index
    %320 = vector.load %arg6[%c0_172, %c0_173] : memref<32x1xf32, #tpu.memory_space<vmem>>, vector<32x1xf32>
    %321 = vector.broadcast %320 : vector<32x1xf32> to vector<32x64xf32>
    %322 = arith.addf %319, %321 : vector<32x64xf32>
    %cst_174 = arith.constant 0.000000e+00 : f32
    %323 = vector.broadcast %cst_174 : f32 to vector<32x64xf32>
    %324 = arith.maximumf %322, %323 : vector<32x64xf32>
    %cst_175 = arith.constant 0.000000e+00 : f32
    %325 = vector.broadcast %cst_175 : f32 to vector<32x64xf32>
    %c0_176 = arith.constant 0 : index
    %c64_177 = arith.constant 64 : index
    %326 = vector.load %arg20[%c0_176, %c64_177] : memref<32x128xf32, #tpu.memory_space<vmem>>, vector<32x64xf32>
    tpu.vector_store %arg20[%c0_176, %c64_177], %325 {strides = array<i32>} : memref<32x128xf32, #tpu.memory_space<vmem>>, vector<32x64xf32>,
    %c0_178 = arith.constant 0 : index
    %c0_179 = arith.constant 0 : index
    %327 = vector.load %arg20[%c0_178, %c0_179] : memref<32x128xf32, #tpu.memory_space<vmem>>, vector<32x64xf32>
    tpu.vector_store %arg20[%c0_178, %c0_179], %324 {strides = array<i32>} : memref<32x128xf32, #tpu.memory_space<vmem>>, vector<32x64xf32>,
    %c0_180 = arith.constant 0 : index
    %c1_181 = arith.constant 1 : index
    %328 = vector.load %arg20[%c0_180, %c1_181] : memref<32x128xf32, #tpu.memory_space<vmem>>, vector<32x64xf32>
    %329 = arith.maximumf %324, %328 : vector<32x64xf32>
    %c0_182 = arith.constant 0 : index
    %c8_183 = arith.constant 8 : index
    %330 = vector.load %arg20[%c0_182, %c8_183] : memref<32x128xf32, #tpu.memory_space<vmem>>, vector<32x64xf32>
    %c0_184 = arith.constant 0 : index
    %c9_185 = arith.constant 9 : index
    %331 = vector.load %arg20[%c0_184, %c9_185] : memref<32x128xf32, #tpu.memory_space<vmem>>, vector<32x64xf32>
    %332 = arith.maximumf %330, %331 : vector<32x64xf32>
    %333 = arith.maximumf %329, %332 : vector<32x64xf32>
    %c0_186 = arith.constant 0 : index
    %c0_187 = arith.constant 0 : index
    %334 = vector.load %arg7[%c0_186, %c0_187] : memref<64x16xf32, #tpu.memory_space<vmem>>, vector<64x16xf32>
    %cst_188 = arith.constant dense<0.000000e+00> : vector<32x16xf32>
    %335 = tpu.matmul %333, %334, %cst_188 {dimension_numbers = #tpu.dot_dimension_numbers<[1], [0], [0], [1], [0, 0, 1, 1], [], []>} : vector<32x64xf32>, vector<64x16xf32>, vector<32x16xf32> -> vector<32x16xf32>
    %c0_189 = arith.constant 0 : index
    %c0_190 = arith.constant 0 : index
    %336 = vector.load %arg21[%c0_189, %c0_190] : memref<32x16xf32, #tpu.memory_space<vmem>>, vector<32x16xf32>
    tpu.vector_store %arg21[%c0_189, %c0_190], %335 {strides = array<i32>} : memref<32x16xf32, #tpu.memory_space<vmem>>, vector<32x16xf32>,
    %cst_191 = arith.constant 0.000000e+00 : f32
    %337 = vector.broadcast %cst_191 : f32 to vector<2x64xf32>
    %c0_192 = arith.constant 0 : index
    %c0_193 = arith.constant 0 : index
    %338 = vector.load %arg21[%c0_192, %c0_193] : memref<32x16xf32, #tpu.memory_space<vmem>>, vector<2x16xf32>
    %339 = arith.truncf %338 : vector<2x16xf32> to vector<2x16xbf16>
    %c0_194 = arith.constant 0 : index
    %c0_195 = arith.constant 0 : index
    %340 = vector.load %arg8[%c0_194, %c0_195] : memref<256x64xbf16, #tpu.memory_space<vmem>>, vector<16x64xbf16>
    %cst_196 = arith.constant dense<0.000000e+00> : vector<2x64xf32>
    %341 = tpu.matmul %339, %340, %cst_196 {dimension_numbers = #tpu.dot_dimension_numbers<[1], [0], [0], [1], [0, 0, 1, 1], [], []>} : vector<2x16xbf16>, vector<16x64xbf16>, vector<2x64xf32> -> vector<2x64xf32>
    %342 = arith.addf %337, %341 : vector<2x64xf32>
    %c2_197 = arith.constant 2 : index
    %c0_198 = arith.constant 0 : index
    %343 = vector.load %arg21[%c2_197, %c0_198] : memref<32x16xf32, #tpu.memory_space<vmem>>, vector<2x16xf32>
    %344 = arith.truncf %343 : vector<2x16xf32> to vector<2x16xbf16>
    %c16_199 = arith.constant 16 : index
    %c0_200 = arith.constant 0 : index
    %345 = vector.load %arg8[%c16_199, %c0_200] : memref<256x64xbf16, #tpu.memory_space<vmem>>, vector<16x64xbf16>
    %cst_201 = arith.constant dense<0.000000e+00> : vector<2x64xf32>
    %346 = tpu.matmul %344, %345, %cst_201 {dimension_numbers = #tpu.dot_dimension_numbers<[1], [0], [0], [1], [0, 0, 1, 1], [], []>} : vector<2x16xbf16>, vector<16x64xbf16>, vector<2x64xf32> -> vector<2x64xf32>
    %347 = arith.addf %342, %346 : vector<2x64xf32>
    %c4 = arith.constant 4 : index
    %c0_202 = arith.constant 0 : index
    %348 = vector.load %arg21[%c4, %c0_202] : memref<32x16xf32, #tpu.memory_space<vmem>>, vector<2x16xf32>
    %349 = arith.truncf %348 : vector<2x16xf32> to vector<2x16xbf16>
    %c32_203 = arith.constant 32 : index
    %c0_204 = arith.constant 0 : index
    %350 = vector.load %arg8[%c32_203, %c0_204] : memref<256x64xbf16, #tpu.memory_space<vmem>>, vector<16x64xbf16>
    %cst_205 = arith.constant dense<0.000000e+00> : vector<2x64xf32>
    %351 = tpu.matmul %349, %350, %cst_205 {dimension_numbers = #tpu.dot_dimension_numbers<[1], [0], [0], [1], [0, 0, 1, 1], [], []>} : vector<2x16xbf16>, vector<16x64xbf16>, vector<2x64xf32> -> vector<2x64xf32>
    %352 = arith.addf %347, %351 : vector<2x64xf32>
    %c6 = arith.constant 6 : index
    %c0_206 = arith.constant 0 : index
    %353 = vector.load %arg21[%c6, %c0_206] : memref<32x16xf32, #tpu.memory_space<vmem>>, vector<2x16xf32>
    %354 = arith.truncf %353 : vector<2x16xf32> to vector<2x16xbf16>
    %c48_207 = arith.constant 48 : index
    %c0_208 = arith.constant 0 : index
    %355 = vector.load %arg8[%c48_207, %c0_208] : memref<256x64xbf16, #tpu.memory_space<vmem>>, vector<16x64xbf16>
    %cst_209 = arith.constant dense<0.000000e+00> : vector<2x64xf32>
    %356 = tpu.matmul %354, %355, %cst_209 {dimension_numbers = #tpu.dot_dimension_numbers<[1], [0], [0], [1], [0, 0, 1, 1], [], []>} : vector<2x16xbf16>, vector<16x64xbf16>, vector<2x64xf32> -> vector<2x64xf32>
    %357 = arith.addf %352, %356 : vector<2x64xf32>
    %c8_210 = arith.constant 8 : index
    %c0_211 = arith.constant 0 : index
    %358 = vector.load %arg21[%c8_210, %c0_211] : memref<32x16xf32, #tpu.memory_space<vmem>>, vector<2x16xf32>
    %359 = arith.truncf %358 : vector<2x16xf32> to vector<2x16xbf16>
    %c64_212 = arith.constant 64 : index
    %c0_213 = arith.constant 0 : index
    %360 = vector.load %arg8[%c64_212, %c0_213] : memref<256x64xbf16, #tpu.memory_space<vmem>>, vector<16x64xbf16>
    %cst_214 = arith.constant dense<0.000000e+00> : vector<2x64xf32>
    %361 = tpu.matmul %359, %360, %cst_214 {dimension_numbers = #tpu.dot_dimension_numbers<[1], [0], [0], [1], [0, 0, 1, 1], [], []>} : vector<2x16xbf16>, vector<16x64xbf16>, vector<2x64xf32> -> vector<2x64xf32>
    %362 = arith.addf %357, %361 : vector<2x64xf32>
    %c10_215 = arith.constant 10 : index
    %c0_216 = arith.constant 0 : index
    %363 = vector.load %arg21[%c10_215, %c0_216] : memref<32x16xf32, #tpu.memory_space<vmem>>, vector<2x16xf32>
    %364 = arith.truncf %363 : vector<2x16xf32> to vector<2x16xbf16>
    %c80_217 = arith.constant 80 : index
    %c0_218 = arith.constant 0 : index
    %365 = vector.load %arg8[%c80_217, %c0_218] : memref<256x64xbf16, #tpu.memory_space<vmem>>, vector<16x64xbf16>
    %cst_219 = arith.constant dense<0.000000e+00> : vector<2x64xf32>
    %366 = tpu.matmul %364, %365, %cst_219 {dimension_numbers = #tpu.dot_dimension_numbers<[1], [0], [0], [1], [0, 0, 1, 1], [], []>} : vector<2x16xbf16>, vector<16x64xbf16>, vector<2x64xf32> -> vector<2x64xf32>
    %367 = arith.addf %362, %366 : vector<2x64xf32>
    %c12 = arith.constant 12 : index
    %c0_220 = arith.constant 0 : index
    %368 = vector.load %arg21[%c12, %c0_220] : memref<32x16xf32, #tpu.memory_space<vmem>>, vector<2x16xf32>
    %369 = arith.truncf %368 : vector<2x16xf32> to vector<2x16xbf16>
    %c96_221 = arith.constant 96 : index
    %c0_222 = arith.constant 0 : index
    %370 = vector.load %arg8[%c96_221, %c0_222] : memref<256x64xbf16, #tpu.memory_space<vmem>>, vector<16x64xbf16>
    %cst_223 = arith.constant dense<0.000000e+00> : vector<2x64xf32>
    %371 = tpu.matmul %369, %370, %cst_223 {dimension_numbers = #tpu.dot_dimension_numbers<[1], [0], [0], [1], [0, 0, 1, 1], [], []>} : vector<2x16xbf16>, vector<16x64xbf16>, vector<2x64xf32> -> vector<2x64xf32>
    %372 = arith.addf %367, %371 : vector<2x64xf32>
    %c14 = arith.constant 14 : index
    %c0_224 = arith.constant 0 : index
    %373 = vector.load %arg21[%c14, %c0_224] : memref<32x16xf32, #tpu.memory_space<vmem>>, vector<2x16xf32>
    %374 = arith.truncf %373 : vector<2x16xf32> to vector<2x16xbf16>
    %c112_225 = arith.constant 112 : index
    %c0_226 = arith.constant 0 : index
    %375 = vector.load %arg8[%c112_225, %c0_226] : memref<256x64xbf16, #tpu.memory_space<vmem>>, vector<16x64xbf16>
    %cst_227 = arith.constant dense<0.000000e+00> : vector<2x64xf32>
    %376 = tpu.matmul %374, %375, %cst_227 {dimension_numbers = #tpu.dot_dimension_numbers<[1], [0], [0], [1], [0, 0, 1, 1], [], []>} : vector<2x16xbf16>, vector<16x64xbf16>, vector<2x64xf32> -> vector<2x64xf32>
    %377 = arith.addf %372, %376 : vector<2x64xf32>
    %c16_228 = arith.constant 16 : index
    %c0_229 = arith.constant 0 : index
    %378 = vector.load %arg21[%c16_228, %c0_229] : memref<32x16xf32, #tpu.memory_space<vmem>>, vector<2x16xf32>
    %379 = arith.truncf %378 : vector<2x16xf32> to vector<2x16xbf16>
    %c128_230 = arith.constant 128 : index
    %c0_231 = arith.constant 0 : index
    %380 = vector.load %arg8[%c128_230, %c0_231] : memref<256x64xbf16, #tpu.memory_space<vmem>>, vector<16x64xbf16>
    %cst_232 = arith.constant dense<0.000000e+00> : vector<2x64xf32>
    %381 = tpu.matmul %379, %380, %cst_232 {dimension_numbers = #tpu.dot_dimension_numbers<[1], [0], [0], [1], [0, 0, 1, 1], [], []>} : vector<2x16xbf16>, vector<16x64xbf16>, vector<2x64xf32> -> vector<2x64xf32>
    %382 = arith.addf %377, %381 : vector<2x64xf32>
    %c18_233 = arith.constant 18 : index
    %c0_234 = arith.constant 0 : index
    %383 = vector.load %arg21[%c18_233, %c0_234] : memref<32x16xf32, #tpu.memory_space<vmem>>, vector<2x16xf32>
    %384 = arith.truncf %383 : vector<2x16xf32> to vector<2x16xbf16>
    %c144 = arith.constant 144 : index
    %c0_235 = arith.constant 0 : index
    %385 = vector.load %arg8[%c144, %c0_235] : memref<256x64xbf16, #tpu.memory_space<vmem>>, vector<16x64xbf16>
    %cst_236 = arith.constant dense<0.000000e+00> : vector<2x64xf32>
    %386 = tpu.matmul %384, %385, %cst_236 {dimension_numbers = #tpu.dot_dimension_numbers<[1], [0], [0], [1], [0, 0, 1, 1], [], []>} : vector<2x16xbf16>, vector<16x64xbf16>, vector<2x64xf32> -> vector<2x64xf32>
    %387 = arith.addf %382, %386 : vector<2x64xf32>
    %c20 = arith.constant 20 : index
    %c0_237 = arith.constant 0 : index
    %388 = vector.load %arg21[%c20, %c0_237] : memref<32x16xf32, #tpu.memory_space<vmem>>, vector<2x16xf32>
    %389 = arith.truncf %388 : vector<2x16xf32> to vector<2x16xbf16>
    %c160 = arith.constant 160 : index
    %c0_238 = arith.constant 0 : index
    %390 = vector.load %arg8[%c160, %c0_238] : memref<256x64xbf16, #tpu.memory_space<vmem>>, vector<16x64xbf16>
    %cst_239 = arith.constant dense<0.000000e+00> : vector<2x64xf32>
    %391 = tpu.matmul %389, %390, %cst_239 {dimension_numbers = #tpu.dot_dimension_numbers<[1], [0], [0], [1], [0, 0, 1, 1], [], []>} : vector<2x16xbf16>, vector<16x64xbf16>, vector<2x64xf32> -> vector<2x64xf32>
    %392 = arith.addf %387, %391 : vector<2x64xf32>
    %c22 = arith.constant 22 : index
    %c0_240 = arith.constant 0 : index
    %393 = vector.load %arg21[%c22, %c0_240] : memref<32x16xf32, #tpu.memory_space<vmem>>, vector<2x16xf32>
    %394 = arith.truncf %393 : vector<2x16xf32> to vector<2x16xbf16>
    %c176 = arith.constant 176 : index
    %c0_241 = arith.constant 0 : index
    %395 = vector.load %arg8[%c176, %c0_241] : memref<256x64xbf16, #tpu.memory_space<vmem>>, vector<16x64xbf16>
    %cst_242 = arith.constant dense<0.000000e+00> : vector<2x64xf32>
    %396 = tpu.matmul %394, %395, %cst_242 {dimension_numbers = #tpu.dot_dimension_numbers<[1], [0], [0], [1], [0, 0, 1, 1], [], []>} : vector<2x16xbf16>, vector<16x64xbf16>, vector<2x64xf32> -> vector<2x64xf32>
    %397 = arith.addf %392, %396 : vector<2x64xf32>
    %c24_243 = arith.constant 24 : index
    %c0_244 = arith.constant 0 : index
    %398 = vector.load %arg21[%c24_243, %c0_244] : memref<32x16xf32, #tpu.memory_space<vmem>>, vector<2x16xf32>
    %399 = arith.truncf %398 : vector<2x16xf32> to vector<2x16xbf16>
    %c192 = arith.constant 192 : index
    %c0_245 = arith.constant 0 : index
    %400 = vector.load %arg8[%c192, %c0_245] : memref<256x64xbf16, #tpu.memory_space<vmem>>, vector<16x64xbf16>
    %cst_246 = arith.constant dense<0.000000e+00> : vector<2x64xf32>
    %401 = tpu.matmul %399, %400, %cst_246 {dimension_numbers = #tpu.dot_dimension_numbers<[1], [0], [0], [1], [0, 0, 1, 1], [], []>} : vector<2x16xbf16>, vector<16x64xbf16>, vector<2x64xf32> -> vector<2x64xf32>
    %402 = arith.addf %397, %401 : vector<2x64xf32>
    %c26 = arith.constant 26 : index
    %c0_247 = arith.constant 0 : index
    %403 = vector.load %arg21[%c26, %c0_247] : memref<32x16xf32, #tpu.memory_space<vmem>>, vector<2x16xf32>
    %404 = arith.truncf %403 : vector<2x16xf32> to vector<2x16xbf16>
    %c208 = arith.constant 208 : index
    %c0_248 = arith.constant 0 : index
    %405 = vector.load %arg8[%c208, %c0_248] : memref<256x64xbf16, #tpu.memory_space<vmem>>, vector<16x64xbf16>
    %cst_249 = arith.constant dense<0.000000e+00> : vector<2x64xf32>
    %406 = tpu.matmul %404, %405, %cst_249 {dimension_numbers = #tpu.dot_dimension_numbers<[1], [0], [0], [1], [0, 0, 1, 1], [], []>} : vector<2x16xbf16>, vector<16x64xbf16>, vector<2x64xf32> -> vector<2x64xf32>
    %407 = arith.addf %402, %406 : vector<2x64xf32>
    %c28 = arith.constant 28 : index
    %c0_250 = arith.constant 0 : index
    %408 = vector.load %arg21[%c28, %c0_250] : memref<32x16xf32, #tpu.memory_space<vmem>>, vector<2x16xf32>
    %409 = arith.truncf %408 : vector<2x16xf32> to vector<2x16xbf16>
    %c224 = arith.constant 224 : index
    %c0_251 = arith.constant 0 : index
    %410 = vector.load %arg8[%c224, %c0_251] : memref<256x64xbf16, #tpu.memory_space<vmem>>, vector<16x64xbf16>
    %cst_252 = arith.constant dense<0.000000e+00> : vector<2x64xf32>
    %411 = tpu.matmul %409, %410, %cst_252 {dimension_numbers = #tpu.dot_dimension_numbers<[1], [0], [0], [1], [0, 0, 1, 1], [], []>} : vector<2x16xbf16>, vector<16x64xbf16>, vector<2x64xf32> -> vector<2x64xf32>
    %412 = arith.addf %407, %411 : vector<2x64xf32>
    %c30 = arith.constant 30 : index
    %c0_253 = arith.constant 0 : index
    %413 = vector.load %arg21[%c30, %c0_253] : memref<32x16xf32, #tpu.memory_space<vmem>>, vector<2x16xf32>
    %414 = arith.truncf %413 : vector<2x16xf32> to vector<2x16xbf16>
    %c240 = arith.constant 240 : index
    %c0_254 = arith.constant 0 : index
    %415 = vector.load %arg8[%c240, %c0_254] : memref<256x64xbf16, #tpu.memory_space<vmem>>, vector<16x64xbf16>
    %cst_255 = arith.constant dense<0.000000e+00> : vector<2x64xf32>
    %416 = tpu.matmul %414, %415, %cst_255 {dimension_numbers = #tpu.dot_dimension_numbers<[1], [0], [0], [1], [0, 0, 1, 1], [], []>} : vector<2x16xbf16>, vector<16x64xbf16>, vector<2x64xf32> -> vector<2x64xf32>
    %417 = arith.addf %412, %416 : vector<2x64xf32>
    %c0_256 = arith.constant 0 : index
    %c0_257 = arith.constant 0 : index
    %418 = vector.load %arg9[%c0_256, %c0_257] : memref<1x64xf32, #tpu.memory_space<vmem>>, vector<1x64xf32>
    %419 = vector.broadcast %418 : vector<1x64xf32> to vector<2x64xf32>
    %420 = arith.addf %417, %419 : vector<2x64xf32>
    %cst_258 = arith.constant 0.000000e+00 : f32
    %421 = vector.broadcast %cst_258 : f32 to vector<2x64xf32>
    %422 = arith.maximumf %420, %421 : vector<2x64xf32>
    %423 = arith.truncf %422 : vector<2x64xf32> to vector<2x64xbf16>
    %c0_259 = arith.constant 0 : index
    %c0_260 = arith.constant 0 : index
    %424 = vector.load %arg10[%c0_259, %c0_260] : memref<64x32xbf16, #tpu.memory_space<vmem>>, vector<64x32xbf16>
    %cst_261 = arith.constant dense<0.000000e+00> : vector<2x32xf32>
    %425 = tpu.matmul %423, %424, %cst_261 {dimension_numbers = #tpu.dot_dimension_numbers<[1], [0], [0], [1], [0, 0, 1, 1], [], []>} : vector<2x64xbf16>, vector<64x32xbf16>, vector<2x32xf32> -> vector<2x32xf32>
    %c0_262 = arith.constant 0 : index
    %c0_263 = arith.constant 0 : index
    %426 = vector.load %arg11[%c0_262, %c0_263] : memref<1x32xf32, #tpu.memory_space<vmem>>, vector<1x32xf32>
    %427 = vector.broadcast %426 : vector<1x32xf32> to vector<2x32xf32>
    %428 = arith.addf %425, %427 : vector<2x32xf32>
    %cst_264 = arith.constant 0.000000e+00 : f32
    %429 = vector.broadcast %cst_264 : f32 to vector<2x32xf32>
    %430 = arith.maximumf %428, %429 : vector<2x32xf32>
    %431 = arith.truncf %430 : vector<2x32xf32> to vector<2x32xbf16>
    %c0_265 = arith.constant 0 : index
    %c0_266 = arith.constant 0 : index
    %432 = vector.load %arg12[%c0_265, %c0_266] : memref<32x128xbf16, #tpu.memory_space<vmem>>, vector<32x128xbf16>
    %cst_267 = arith.constant dense<0.000000e+00> : vector<2x128xf32>
    %433 = tpu.matmul %431, %432, %cst_267 {dimension_numbers = #tpu.dot_dimension_numbers<[1], [0], [0], [1], [0, 0, 1, 1], [], []>} : vector<2x32xbf16>, vector<32x128xbf16>, vector<2x128xf32> -> vector<2x128xf32>
    %c0_268 = arith.constant 0 : index
    %c0_269 = arith.constant 0 : index
    %434 = vector.load %arg13[%c0_268, %c0_269] : memref<1x128xf32, #tpu.memory_space<vmem>>, vector<1x128xf32>
    %435 = vector.broadcast %434 : vector<1x128xf32> to vector<2x128xf32>
    %436 = arith.addf %433, %435 : vector<2x128xf32>
    %c0_270 = arith.constant 0 : index
    %c0_271 = arith.constant 0 : index
    %c0_272 = arith.constant 0 : index
    %437 = vector.load %arg14[%c0_270, %c0_271, %c0_272] : memref<1x2x128xf32, #tpu.memory_space<vmem>>, vector<1x2x128xf32>
    %438 = vector.shape_cast %437 : vector<1x2x128xf32> to vector<2x128xf32>
    %439 = vector.shape_cast %436 : vector<2x128xf32> to vector<1x2x128xf32>
    tpu.vector_store %arg14[%c0_270, %c0_271, %c0_272], %439 {strides = array<i32>} : memref<1x2x128xf32, #tpu.memory_space<vmem>>, vector<1x2x128xf32>,
    return
  }
  func.func @transform_0(%arg0: i32) -> (i32, i32, i32) {
    %c0_i32 = arith.constant 0 : i32
    %c0_i32_0 = arith.constant 0 : i32
    %c0_i32_1 = arith.constant 0 : i32
    return %arg0, %c0_i32, %c0_i32_0 : i32, i32, i32
  }
  func.func @transform_1(%arg0: i32) -> (i32, i32) {
    %c0_i32 = arith.constant 0 : i32
    %c0_i32_0 = arith.constant 0 : i32
    %c0_i32_1 = arith.constant 0 : i32
    return %c0_i32, %c0_i32_0 : i32, i32
  }
  func.func @transform_2(%arg0: i32) -> (i32, i32) {
    %c0_i32 = arith.constant 0 : i32
    %c0_i32_0 = arith.constant 0 : i32
    %c0_i32_1 = arith.constant 0 : i32
    return %c0_i32, %c0_i32_0 : i32, i32
  }
  func.func @transform_3(%arg0: i32) -> (i32, i32) {
    %c0_i32 = arith.constant 0 : i32
    %c0_i32_0 = arith.constant 0 : i32
    %c0_i32_1 = arith.constant 0 : i32
    return %c0_i32, %c0_i32_0 : i32, i32
  }
  func.func @transform_4(%arg0: i32) -> (i32, i32) {
    %c0_i32 = arith.constant 0 : i32
    %c0_i32_0 = arith.constant 0 : i32
    %c0_i32_1 = arith.constant 0 : i32
    return %c0_i32, %c0_i32_0 : i32, i32
  }
  func.func @transform_5(%arg0: i32) -> (i32, i32) {
    %c0_i32 = arith.constant 0 : i32
    %c0_i32_0 = arith.constant 0 : i32
    %c0_i32_1 = arith.constant 0 : i32
    return %c0_i32, %c0_i32_0 : i32, i32
  }
  func.func @transform_6(%arg0: i32) -> (i32, i32) {
    %c0_i32 = arith.constant 0 : i32
    %c0_i32_0 = arith.constant 0 : i32
    %c0_i32_1 = arith.constant 0 : i32
    return %c0_i32, %c0_i32_0 : i32, i32
  }
  func.func @transform_7(%arg0: i32) -> (i32, i32) {
    %c0_i32 = arith.constant 0 : i32
    %c0_i32_0 = arith.constant 0 : i32
    %c0_i32_1 = arith.constant 0 : i32
    return %c0_i32, %c0_i32_0 : i32, i32
  }
  func.func @transform_8(%arg0: i32) -> (i32, i32) {
    %c0_i32 = arith.constant 0 : i32
    %c0_i32_0 = arith.constant 0 : i32
    %c0_i32_1 = arith.constant 0 : i32
    return %c0_i32, %c0_i32_0 : i32, i32
  }
  func.func @transform_9(%arg0: i32) -> (i32, i32) {
    %c0_i32 = arith.constant 0 : i32
    %c0_i32_0 = arith.constant 0 : i32
    %c0_i32_1 = arith.constant 0 : i32
    return %c0_i32, %c0_i32_0 : i32, i32
  }
  func.func @transform_10(%arg0: i32) -> (i32, i32) {
    %c0_i32 = arith.constant 0 : i32
    %c0_i32_0 = arith.constant 0 : i32
    %c0_i32_1 = arith.constant 0 : i32
    return %c0_i32, %c0_i32_0 : i32, i32
  }
  func.func @transform_11(%arg0: i32) -> (i32, i32) {
    %c0_i32 = arith.constant 0 : i32
    %c0_i32_0 = arith.constant 0 : i32
    %c0_i32_1 = arith.constant 0 : i32
    return %c0_i32, %c0_i32_0 : i32, i32
  }
  func.func @transform_12(%arg0: i32) -> (i32, i32) {
    %c0_i32 = arith.constant 0 : i32
    %c0_i32_0 = arith.constant 0 : i32
    %c0_i32_1 = arith.constant 0 : i32
    return %c0_i32, %c0_i32_0 : i32, i32
  }
  func.func @transform_13(%arg0: i32) -> (i32, i32, i32) {
    %c0_i32 = arith.constant 0 : i32
    %c0_i32_0 = arith.constant 0 : i32
    %c0_i32_1 = arith.constant 0 : i32
    return %arg0, %c0_i32, %c0_i32_0 : i32, i32, i32
  }
}

</mosaic_0001>

<llo_original>
// kernel: tpu_custom_call.1
$region0: #{tpu_custom_call.1}
  #allocation0 [shape = 'u32[]', space=smem, size = 0x4, offset = 0x4, fixed_abs, tag = 'smem constant byte address 0x4 - core index']
  #allocation1 [shape = 'u32[72,128]{1,0:T(1,128)}', space=vmem, size = 0x9000, scoped, tag = 'internal scratch']
  #allocation2 [shape = 'f32[8,384]{1,0:T(8,128)}', space=vmem, size = 0x3000, scoped, tag = 'scratch operand']
  #allocation3 [shape = 'bf16[72,256]{1,0:T(8,128)(2,1)}', space=vmem, size = 0x9000, scoped, tag = 'scratch operand']
  #allocation4 [shape = 'f32[16,384]{1,0:T(8,128)}', space=vmem, size = 0x6000, scoped, tag = 'scratch operand']
  #allocation5 [shape = 'f32[16,128]{1,0:T(8,128)}', space=vmem, size = 0x2000, scoped, tag = 'scratch operand']
  #allocation6 [shape = 'bf16[144,64]{1,0:T(8,128)(2,1)}', space=vmem, size = 0x9000, scoped, tag = 'scratch operand']
  #allocation7 [shape = 'f32[32,128]{1,0:T(8,128)}', space=vmem, size = 0x4000, scoped, tag = 'scratch operand']
  #allocation8 [shape = 'f32[32,16]{1,0:T(8,128)}', space=vmem, size = 0x4000, scoped, tag = 'scratch operand']
  %s0 = inlined_call_operand.vmem [shape: f32[2,8,256], index: 0, kind: input, shape index: {}]
  %s1 = inlined_call_operand.vmem [shape: bf16[16,72], index: 1, kind: input, shape index: {}]
  %s2 = inlined_call_operand.vmem [shape: f32[16,1], index: 2, kind: input, shape index: {}]
  %s3 = inlined_call_operand.vmem [shape: f32[256,64], index: 3, kind: input, shape index: {}]
  %s4 = inlined_call_operand.vmem [shape: bf16[32,144], index: 4, kind: input, shape index: {}]
  %s5 = inlined_call_operand.vmem [shape: f32[32,1], index: 5, kind: input, shape index: {}]
  %s6 = inlined_call_operand.vmem [shape: f32[64,16], index: 6, kind: input, shape index: {}]
  %s7 = inlined_call_operand.vmem [shape: bf16[256,64], index: 7, kind: input, shape index: {}]
  %s8 = inlined_call_operand.vmem [shape: f32[1,64], index: 8, kind: input, shape index: {}]
  %s9 = inlined_call_operand.vmem [shape: bf16[64,32], index: 9, kind: input, shape index: {}]
  %s10 = inlined_call_operand.vmem [shape: f32[1,32], index: 10, kind: input, shape index: {}]
  %s11 = inlined_call_operand.vmem [shape: bf16[32,128], index: 11, kind: input, shape index: {}]
  %s12 = inlined_call_operand.vmem [shape: f32[1,128], index: 12, kind: input, shape index: {}]
  %s13 = inlined_call_operand.hbm [shape: f32[2,2,128], index: 13, kind: output, shape index: {}]
  %s14 = sld [smem:[#allocation0]]
  $region85: #{tpu_custom_call.1} parent=0
    _
  %s16 = ssub.s32 1, %s14
  %s17 = scalar_select 0, %s16, %s14
  $region1: #{tpu_custom_call.1} parent=0
    #allocation9 [shape = 'u8[2048]{0}', space=vmem, size = 0x800, scoped, tag = 'output window, operand 0']
    #allocation10 [shape = 's32[2]{0}', space=sflag, size = 0x8, scoped, tag = 'scoped memory for tpu_custom_call.1']
    %18 = vsyncpa [#allocation10], 0
    %s19 = scalar_lea.sflag [#allocation10], 1
    %20 = vsyncpa %s19, 0
    loop: start=0, step=1, limit=4
    $region2: #{tpu_custom_call.1} parent=1 // loop_pre_header
      _
    $region3: #{tpu_custom_call.1} parent=1 // loop_header
      %s22 = sphi 0, %s26
      %p23 = scmp.ge.s32.totalorder %s22, 4
      %s32 = sphi 0, %s34
      %s35 = sphi 0, %s32
      %s36 = sphi 0, %s35
      %s52 = sphi 0, %s36
      %s56 = sphi 0, %s56
      %s58 = sphi 0, %s56
      %s59 = sphi 0, %s58
      %s73 = sphi 0, %s59
      %s77 = sphi 0, %s77
      %s79 = sphi 0, %s77
      %s80 = sphi 0, %s79
      %s94 = sphi 0, %s80
      %s98 = sphi 0, %s98
      %s100 = sphi 0, %s98
      %s101 = sphi 0, %s100
      %s115 = sphi 0, %s101
      %s119 = sphi 0, %s119
      %s121 = sphi 0, %s119
      %s122 = sphi 0, %s121
      %s136 = sphi 0, %s122
      %s140 = sphi 0, %s140
      %s142 = sphi 0, %s140
      %s143 = sphi 0, %s142
      %s157 = sphi 0, %s143
      %s161 = sphi 0, %s161
      %s163 = sphi 0, %s161
      %s164 = sphi 0, %s163
      %s178 = sphi 0, %s164
      %s182 = sphi 0, %s182
      %s184 = sphi 0, %s182
      %s185 = sphi 0, %s184
      %s199 = sphi 0, %s185
      %s203 = sphi 0, %s203
      %s205 = sphi 0, %s203
      %s206 = sphi 0, %s205
      %s220 = sphi 0, %s206
      %s224 = sphi 0, %s224
      %s226 = sphi 0, %s224
      %s227 = sphi 0, %s226
      %s241 = sphi 0, %s227
      %s245 = sphi 0, %s245
      %s247 = sphi 0, %s245
      %s248 = sphi 0, %s247
      %s262 = sphi 0, %s248
      %s266 = sphi 0, %s266
      %s268 = sphi 0, %s266
      %s269 = sphi 0, %s268
      %s283 = sphi 0, %s269
      %s287 = sphi 0, %s287
      %s289 = sphi 0, %s287
      %s290 = sphi 0, %s289
      %s304 = sphi 0, %s290
      %s310 = sphi 0, %s312
      %s313 = sphi 0, %s310
      %s314 = sphi 0, %s313
      %s330 = sphi 0, %s314
    $region4: #{tpu_custom_call.1} parent=1 // loop_header_branch
      %25 = sbr.rel (%p23) target = $region8
    $region5: #{tpu_custom_call.1} parent=1 // loop_body
      %s27 = ssub.s32 %s22, 1
      %s28 = ssub.s32 %s22, 2
      %s29 = sadd.s32 %s22, 1
      %s30 = ssub.s32 %s22, %s29
      %p31 = scmp.eq.s32.totalorder %s30, 0
      %s33 = sadd.s32 %s32, 1
      %s34 = scalar_select %p31, %s32, %s33
      %p37 = pneg %p31
      %p38 = scmp.eq.s32.totalorder %s22, 1
      %p39 = por %p37, %p38
      %p40 = scmp.ne.s32.totalorder %s32, %s35
      %p41 = scmp.eq.s32.totalorder %s22, 0
      %p42 = por %p40, %p41
      %p43 = scmp.ne.s32.totalorder %s32, %s35
      %p44 = scmp.eq.s32.totalorder %s27, 1
      %p45 = por %p43, %p44
      %p46 = scmp.ne.s32.totalorder %s35, %s36
      %p47 = scmp.eq.s32.totalorder %s27, 0
      %p48 = por %p46, %p47
      %p49 = scmp.ne.s32.totalorder %s35, %s36
      %p50 = scmp.eq.s32.totalorder %s28, 1
      %p51 = por %p49, %p50
      %p53 = scmp.ne.s32.totalorder %s36, %s52
      %p54 = scmp.eq.s32.totalorder %s28, 0
      %p55 = por %p53, %p54
      %s57 = sadd.s32 %s56, 1
      %p60 = scmp.eq.s32.totalorder %s22, 1
      %p61 = scmp.ne.s32.totalorder %s56, %s58
      %p62 = scmp.eq.s32.totalorder %s22, 0
      %p63 = por %p61, %p62
      %p64 = scmp.ne.s32.totalorder %s56, %s58
      %p65 = scmp.eq.s32.totalorder %s27, 1
      %p66 = por %p64, %p65
      %p67 = scmp.ne.s32.totalorder %s58, %s59
      %p68 = scmp.eq.s32.totalorder %s27, 0
      %p69 = por %p67, %p68
      %p70 = scmp.ne.s32.totalorder %s58, %s59
      %p71 = scmp.eq.s32.totalorder %s28, 1
      %p72 = por %p70, %p71
      %p74 = scmp.ne.s32.totalorder %s59, %s73
      %p75 = scmp.eq.s32.totalorder %s28, 0
      %p76 = por %p74, %p75
      %s78 = sadd.s32 %s77, 1
      %p81 = scmp.eq.s32.totalorder %s22, 1
      %p82 = scmp.ne.s32.totalorder %s77, %s79
      %p83 = scmp.eq.s32.totalorder %s22, 0
      %p84 = por %p82, %p83
      %p85 = scmp.ne.s32.totalorder %s77, %s79
      %p86 = scmp.eq.s32.totalorder %s27, 1
      %p87 = por %p85, %p86
      %p88 = scmp.ne.s32.totalorder %s79, %s80
      %p89 = scmp.eq.s32.totalorder %s27, 0
      %p90 = por %p88, %p89
      %p91 = scmp.ne.s32.totalorder %s79, %s80
      %p92 = scmp.eq.s32.totalorder %s28, 1
      %p93 = por %p91, %p92
      %p95 = scmp.ne.s32.totalorder %s80, %s94
      %p96 = scmp.eq.s32.totalorder %s28, 0
      %p97 = por %p95, %p96
      %s99 = sadd.s32 %s98, 1
      %p102 = scmp.eq.s32.totalorder %s22, 1
      %p103 = scmp.ne.s32.totalorder %s98, %s100
      %p104 = scmp.eq.s32.totalorder %s22, 0
      %p105 = por %p103, %p104
      %p106 = scmp.ne.s32.totalorder %s98, %s100
      %p107 = scmp.eq.s32.totalorder %s27, 1
      %p108 = por %p106, %p107
      %p109 = scmp.ne.s32.totalorder %s100, %s101
      %p110 = scmp.eq.s32.totalorder %s27, 0
      %p111 = por %p109, %p110
      %p112 = scmp.ne.s32.totalorder %s100, %s101
      %p113 = scmp.eq.s32.totalorder %s28, 1
      %p114 = por %p112, %p113
      %p116 = scmp.ne.s32.totalorder %s101, %s115
      %p117 = scmp.eq.s32.totalorder %s28, 0
      %p118 = por %p116, %p117
      %s120 = sadd.s32 %s119, 1
      %p123 = scmp.eq.s32.totalorder %s22, 1
      %p124 = scmp.ne.s32.totalorder %s119, %s121
      %p125 = scmp.eq.s32.totalorder %s22, 0
      %p126 = por %p124, %p125
      %p127 = scmp.ne.s32.totalorder %s119, %s121
      %p128 = scmp.eq.s32.totalorder %s27, 1
      %p129 = por %p127, %p128
      %p130 = scmp.ne.s32.totalorder %s121, %s122
      %p131 = scmp.eq.s32.totalorder %s27, 0
      %p132 = por %p130, %p131
      %p133 = scmp.ne.s32.totalorder %s121, %s122
      %p134 = scmp.eq.s32.totalorder %s28, 1
      %p135 = por %p133, %p134
      %p137 = scmp.ne.s32.totalorder %s122, %s136
      %p138 = scmp.eq.s32.totalorder %s28, 0
      %p139 = por %p137, %p138
      %s141 = sadd.s32 %s140, 1
      %p144 = scmp.eq.s32.totalorder %s22, 1
      %p145 = scmp.ne.s32.totalorder %s140, %s142
      %p146 = scmp.eq.s32.totalorder %s22, 0
      %p147 = por %p145, %p146
      %p148 = scmp.ne.s32.totalorder %s140, %s142
      %p149 = scmp.eq.s32.totalorder %s27, 1
      %p150 = por %p148, %p149
      %p151 = scmp.ne.s32.totalorder %s142, %s143
      %p152 = scmp.eq.s32.totalorder %s27, 0
      %p153 = por %p151, %p152
      %p154 = scmp.ne.s32.totalorder %s142, %s143
      %p155 = scmp.eq.s32.totalorder %s28, 1
      %p156 = por %p154, %p155
      %p158 = scmp.ne.s32.totalorder %s143, %s157
      %p159 = scmp.eq.s32.totalorder %s28, 0
      %p160 = por %p158, %p159
      %s162 = sadd.s32 %s161, 1
      %p165 = scmp.eq.s32.totalorder %s22, 1
      %p166 = scmp.ne.s32.totalorder %s161, %s163
      %p167 = scmp.eq.s32.totalorder %s22, 0
      %p168 = por %p166, %p167
      %p169 = scmp.ne.s32.totalorder %s161, %s163
      %p170 = scmp.eq.s32.totalorder %s27, 1
      %p171 = por %p169, %p170
      %p172 = scmp.ne.s32.totalorder %s163, %s164
      %p173 = scmp.eq.s32.totalorder %s27, 0
      %p174 = por %p172, %p173
      %p175 = scmp.ne.s32.totalorder %s163, %s164
      %p176 = scmp.eq.s32.totalorder %s28, 1
      %p177 = por %p175, %p176
      %p179 = scmp.ne.s32.totalorder %s164, %s178
      %p180 = scmp.eq.s32.totalorder %s28, 0
      %p181 = por %p179, %p180
      %s183 = sadd.s32 %s182, 1
      %p186 = scmp.eq.s32.totalorder %s22, 1
      %p187 = scmp.ne.s32.totalorder %s182, %s184
      %p188 = scmp.eq.s32.totalorder %s22, 0
      %p189 = por %p187, %p188
      %p190 = scmp.ne.s32.totalorder %s182, %s184
      %p191 = scmp.eq.s32.totalorder %s27, 1
      %p192 = por %p190, %p191
      %p193 = scmp.ne.s32.totalorder %s184, %s185
      %p194 = scmp.eq.s32.totalorder %s27, 0
      %p195 = por %p193, %p194
      %p196 = scmp.ne.s32.totalorder %s184, %s185
      %p197 = scmp.eq.s32.totalorder %s28, 1
      %p198 = por %p196, %p197
      %p200 = scmp.ne.s32.totalorder %s185, %s199
      %p201 = scmp.eq.s32.totalorder %s28, 0
      %p202 = por %p200, %p201
      %s204 = sadd.s32 %s203, 1
      %p207 = scmp.eq.s32.totalorder %s22, 1
      %p208 = scmp.ne.s32.totalorder %s203, %s205
      %p209 = scmp.eq.s32.totalorder %s22, 0
      %p210 = por %p208, %p209
      %p211 = scmp.ne.s32.totalorder %s203, %s205
      %p212 = scmp.eq.s32.totalorder %s27, 1
      %p213 = por %p211, %p212
      %p214 = scmp.ne.s32.totalorder %s205, %s206
      %p215 = scmp.eq.s32.totalorder %s27, 0
      %p216 = por %p214, %p215
      %p217 = scmp.ne.s32.totalorder %s205, %s206
      %p218 = scmp.eq.s32.totalorder %s28, 1
      %p219 = por %p217, %p218
      %p221 = scmp.ne.s32.totalorder %s206, %s220
      %p222 = scmp.eq.s32.totalorder %s28, 0
      %p223 = por %p221, %p222
      %s225 = sadd.s32 %s224, 1
      %p228 = scmp.eq.s32.totalorder %s22, 1
      %p229 = scmp.ne.s32.totalorder %s224, %s226
      %p230 = scmp.eq.s32.totalorder %s22, 0
      %p231 = por %p229, %p230
      %p232 = scmp.ne.s32.totalorder %s224, %s226
      %p233 = scmp.eq.s32.totalorder %s27, 1
      %p234 = por %p232, %p233
      %p235 = scmp.ne.s32.totalorder %s226, %s227
      %p236 = scmp.eq.s32.totalorder %s27, 0
      %p237 = por %p235, %p236
      %p238 = scmp.ne.s32.totalorder %s226, %s227
      %p239 = scmp.eq.s32.totalorder %s28, 1
      %p240 = por %p238, %p239
      %p242 = scmp.ne.s32.totalorder %s227, %s241
      %p243 = scmp.eq.s32.totalorder %s28, 0
      %p244 = por %p242, %p243
      %s246 = sadd.s32 %s245, 1
      %p249 = scmp.eq.s32.totalorder %s22, 1
      %p250 = scmp.ne.s32.totalorder %s245, %s247
      %p251 = scmp.eq.s32.totalorder %s22, 0
      %p252 = por %p250, %p251
      %p253 = scmp.ne.s32.totalorder %s245, %s247
      %p254 = scmp.eq.s32.totalorder %s27, 1
      %p255 = por %p253, %p254
      %p256 = scmp.ne.s32.totalorder %s247, %s248
      %p257 = scmp.eq.s32.totalorder %s27, 0
      %p258 = por %p256, %p257
      %p259 = scmp.ne.s32.totalorder %s247, %s248
      %p260 = scmp.eq.s32.totalorder %s28, 1
      %p261 = por %p259, %p260
      %p263 = scmp.ne.s32.totalorder %s248, %s262
      %p264 = scmp.eq.s32.totalorder %s28, 0
      %p265 = por %p263, %p264
      %s267 = sadd.s32 %s266, 1
      %p270 = scmp.eq.s32.totalorder %s22, 1
      %p271 = scmp.ne.s32.totalorder %s266, %s268
      %p272 = scmp.eq.s32.totalorder %s22, 0
      %p273 = por %p271, %p272
      %p274 = scmp.ne.s32.totalorder %s266, %s268
      %p275 = scmp.eq.s32.totalorder %s27, 1
      %p276 = por %p274, %p275
      %p277 = scmp.ne.s32.totalorder %s268, %s269
      %p278 = scmp.eq.s32.totalorder %s27, 0
      %p279 = por %p277, %p278
      %p280 = scmp.ne.s32.totalorder %s268, %s269
      %p281 = scmp.eq.s32.totalorder %s28, 1
      %p282 = por %p280, %p281
      %p284 = scmp.ne.s32.totalorder %s269, %s283
      %p285 = scmp.eq.s32.totalorder %s28, 0
      %p286 = por %p284, %p285
      %s288 = sadd.s32 %s287, 1
      %p291 = scmp.eq.s32.totalorder %s22, 1
      %p292 = scmp.ne.s32.totalorder %s287, %s289
      %p293 = scmp.eq.s32.totalorder %s22, 0
      %p294 = por %p292, %p293
      %p295 = scmp.ne.s32.totalorder %s287, %s289
      %p296 = scmp.eq.s32.totalorder %s27, 1
      %p297 = por %p295, %p296
      %p298 = scmp.ne.s32.totalorder %s289, %s290
      %p299 = scmp.eq.s32.totalorder %s27, 0
      %p300 = por %p298, %p299
      %p301 = scmp.ne.s32.totalorder %s289, %s290
      %p302 = scmp.eq.s32.totalorder %s28, 1
      %p303 = por %p301, %p302
      %p305 = scmp.ne.s32.totalorder %s290, %s304
      %p306 = scmp.eq.s32.totalorder %s28, 0
      %p307 = por %p305, %p306
      %s308 = ssub.s32 %s22, %s29
      %p309 = scmp.eq.s32.totalorder %s308, 0
      %s311 = sadd.s32 %s310, 1
      %s312 = scalar_select %p309, %s310, %s311
      %p315 = pneg %p309
      %p316 = scmp.eq.s32.totalorder %s22, 1
      %p317 = por %p315, %p316
      %p318 = scmp.ne.s32.totalorder %s310, %s313
      %p319 = scmp.eq.s32.totalorder %s22, 0
      %p320 = por %p318, %p319
      %p321 = scmp.ne.s32.totalorder %s310, %s313
      %p322 = scmp.eq.s32.totalorder %s27, 1
      %p323 = por %p321, %p322
      %p324 = scmp.ne.s32.totalorder %s313, %s314
      %p325 = scmp.eq.s32.totalorder %s27, 0
      %p326 = por %p324, %p325
      %p327 = scmp.ne.s32.totalorder %s313, %s314
      %p328 = scmp.eq.s32.totalorder %s28, 1
      %p329 = por %p327, %p328
      %p331 = scmp.ne.s32.totalorder %s314, %s330
      %p332 = scmp.eq.s32.totalorder %s28, 0
      %p333 = por %p331, %p332
      %p334 = scmp.le.s32.totalorder 1, %s22
      %p335 = scmp.lt.s32.totalorder %s22, 3
      %p336 = pnand %p334, %p335
      %p337 = pneg %p336
      // Predicated region
      $region9: #{tpu_custom_call.1} parent=5 // pred_check
        _
      $region10: #{tpu_custom_call.1} parent=5 // pred_check_branch
        %339 = sbr.rel (%p336) target = $region12
      $region11: #{tpu_custom_call.1} parent=5 // pred_region
        %s340 = ssub.s32 %s22, 1
        // Predicated region
        $region13: #{tpu_custom_call.1} parent=11 // pred_check
          %p341 = pneg %p69
        $region14: #{tpu_custom_call.1} parent=11 // pred_check_branch
          %343 = sbr.rel (%p341) target = $region16
        $region15: #{tpu_custom_call.1} parent=11 // pred_region
          _
        $region16: #{tpu_custom_call.1} parent=11 // pred_fallthru
          _
        // Predicated region
        $region17: #{tpu_custom_call.1} parent=11 // pred_check
          %p344 = pneg %p90
        $region18: #{tpu_custom_call.1} parent=11 // pred_check_branch
          %346 = sbr.rel (%p344) target = $region20
        $region19: #{tpu_custom_call.1} parent=11 // pred_region
          _
        $region20: #{tpu_custom_call.1} parent=11 // pred_fallthru
          _
        // Predicated region
        $region21: #{tpu_custom_call.1} parent=11 // pred_check
          %p347 = pneg %p111
        $region22: #{tpu_custom_call.1} parent=11 // pred_check_branch
          %349 = sbr.rel (%p347) target = $region24
        $region23: #{tpu_custom_call.1} parent=11 // pred_region
          _
        $region24: #{tpu_custom_call.1} parent=11 // pred_fallthru
          _
        // Predicated region
        $region25: #{tpu_custom_call.1} parent=11 // pred_check
          %p350 = pneg %p132
        $region26: #{tpu_custom_call.1} parent=11 // pred_check_branch
          %352 = sbr.rel (%p350) target = $region28
        $region27: #{tpu_custom_call.1} parent=11 // pred_region
          _
        $region28: #{tpu_custom_call.1} parent=11 // pred_fallthru
          _
        // Predicated region
        $region29: #{tpu_custom_call.1} parent=11 // pred_check
          %p353 = pneg %p153
        $region30: #{tpu_custom_call.1} parent=11 // pred_check_branch
          %355 = sbr.rel (%p353) target = $region32
        $region31: #{tpu_custom_call.1} parent=11 // pred_region
          _
        $region32: #{tpu_custom_call.1} parent=11 // pred_fallthru
          _
        // Predicated region
        $region33: #{tpu_custom_call.1} parent=11 // pred_check
          %p356 = pneg %p174
        $region34: #{tpu_custom_call.1} parent=11 // pred_check_branch
          %358 = sbr.rel (%p356) target = $region36
        $region35: #{tpu_custom_call.1} parent=11 // pred_region
          _
        $region36: #{tpu_custom_call.1} parent=11 // pred_fallthru
          _
        // Predicated region
        $region37: #{tpu_custom_call.1} parent=11 // pred_check
          %p359 = pneg %p195
        $region38: #{tpu_custom_call.1} parent=11 // pred_check_branch
          %361 = sbr.rel (%p359) target = $region40
        $region39: #{tpu_custom_call.1} parent=11 // pred_region
          _
        $region40: #{tpu_custom_call.1} parent=11 // pred_fallthru
          _
        // Predicated region
        $region41: #{tpu_custom_call.1} parent=11 // pred_check
          %p362 = pneg %p216
        $region42: #{tpu_custom_call.1} parent=11 // pred_check_branch
          %364 = sbr.rel (%p362) target = $region44
        $region43: #{tpu_custom_call.1} parent=11 // pred_region
          _
        $region44: #{tpu_custom_call.1} parent=11 // pred_fallthru
          _
        // Predicated region
        $region45: #{tpu_custom_call.1} parent=11 // pred_check
          %p365 = pneg %p237
        $region46: #{tpu_custom_call.1} parent=11 // pred_check_branch
          %367 = sbr.rel (%p365) target = $region48
        $region47: #{tpu_custom_call.1} parent=11 // pred_region
          _
        $region48: #{tpu_custom_call.1} parent=11 // pred_fallthru
          _
        // Predicated region
        $region49: #{tpu_custom_call.1} parent=11 // pred_check
          %p368 = pneg %p258
        $region50: #{tpu_custom_call.1} parent=11 // pred_check_branch
          %370 = sbr.rel (%p368) target = $region52
        $region51: #{tpu_custom_call.1} parent=11 // pred_region
          _
        $region52: #{tpu_custom_call.1} parent=11 // pred_fallthru
          _
        // Predicated region
        $region53: #{tpu_custom_call.1} parent=11 // pred_check
          %p371 = pneg %p279
        $region54: #{tpu_custom_call.1} parent=11 // pred_check_branch
          %373 = sbr.rel (%p371) target = $region56
        $region55: #{tpu_custom_call.1} parent=11 // pred_region
          _
        $region56: #{tpu_custom_call.1} parent=11 // pred_fallthru
          _
        // Predicated region
        $region57: #{tpu_custom_call.1} parent=11 // pred_check
          %p374 = pneg %p300
        $region58: #{tpu_custom_call.1} parent=11 // pred_check_branch
          %376 = sbr.rel (%p374) target = $region60
        $region59: #{tpu_custom_call.1} parent=11 // pred_region
          _
        $region60: #{tpu_custom_call.1} parent=11 // pred_fallthru
          _
      $region12: #{tpu_custom_call.1} parent=5 // pred_fallthru
        _
      %p377 = scmp.lt.s32.totalorder %s22, 2
      // Predicated region
      $region61: #{tpu_custom_call.1} parent=5 // pred_check
        %p378 = pneg %p377
      $region62: #{tpu_custom_call.1} parent=5 // pred_check_branch
        %380 = sbr.rel (%p378) target = $region64
      $region63: #{tpu_custom_call.1} parent=5 // pred_region
        // Predicated region
        $region65: #{tpu_custom_call.1} parent=63 // pred_check
          %p381 = pneg %p42
        $region66: #{tpu_custom_call.1} parent=63 // pred_check_branch
          %383 = sbr.rel (%p381) target = $region68
        $region67: #{tpu_custom_call.1} parent=63 // pred_region
          %p384 = scmp.lt.s32.totalorder %s22, 1
          %s385 = scalar_select %p384, %s22, 1
          %s386 = smul.addr %s385, 2
          %s387 = smul.addr %s386, 8
          %s388 = scalar_lea.vmem %s0, %s387
        $region68: #{tpu_custom_call.1} parent=63 // pred_fallthru
          _
      $region64: #{tpu_custom_call.1} parent=5 // pred_fallthru
        _
      %p389 = scmp.le.s32.totalorder 1, %s22
      %p390 = scmp.lt.s32.totalorder %s22, 3
      %p391 = pnand %p389, %p390
      %p392 = pneg %p391
      // Predicated region
      $region69: #{tpu_custom_call.1} parent=5 // pred_check
        _
      $region70: #{tpu_custom_call.1} parent=5 // pred_check_branch
        %394 = sbr.rel (%p391) target = $region72
      $region71: #{tpu_custom_call.1} parent=5 // pred_region
        %s395 = ssub.s32 %s22, 1
        %p396 = scmp.lt.s32.totalorder %s27, 1
        %s397 = scalar_select %p396, %s27, 1
        %s398 = smul.addr %s397, 2
        %s399 = smul.addr %s398, 8
        %s400 = scalar_lea.vmem %s0, %s399
        %p401 = pneg %p48
        %p402 = pneg %p45
        %p403 = pneg %p69
        %p404 = pneg %p66
        %p405 = pneg %p90
        %p406 = pneg %p87
        %p407 = pneg %p111
        %p408 = pneg %p108
        %p409 = pneg %p132
        %p410 = pneg %p129
        %p411 = pneg %p153
        %p412 = pneg %p150
        %p413 = pneg %p174
        %p414 = pneg %p171
        %p415 = pneg %p195
        %p416 = pneg %p192
        %p417 = pneg %p216
        %p418 = pneg %p213
        %p419 = pneg %p237
        %p420 = pneg %p234
        %p421 = pneg %p258
        %p422 = pneg %p255
        %p423 = pneg %p279
        %p424 = pneg %p276
        %p425 = pneg %p300
        %p426 = pneg %p297
        %p427 = pneg %p326
        %p428 = pneg %p323
        %s429 = sand.u32 %s313, 1
        %s430 = scalar_lea.sflag [#allocation10], %s429
        %s431 = sand.u32 %s313, 1
        %s432 = smul.addr %s431, 2
        %s433 = scalar_lea.vmem [#allocation9], %s432
        %p434 = scmp.lt.s32.totalorder %s27, 1
        %s435 = scalar_select %p434, %s27, 1
        %s436 = smul.addr %s435, 2
        %s437 = smul.addr %s436, 8
        %s438 = scalar_lea.vmem %s0, %s437
        %v440 = vld [vmem:[%s438] sm:$0xff]
        %v441 = vld [vmem:[%s438 + $0x8] sm:$0xff]
        %vm442 = vcmask 138240
        %443 = vst.msk [vmem:[#allocation2] sm:$0xff] %vm442, 0.0
        %vm444 = vcmask 1047688
        %445 = vst.msk [vmem:[#allocation2 + $0x10] sm:$0xff] %vm444, 0.0
        %448 = vrot.lane.b32.xlu0 %v440, 17
        %v449 = vpop.permute.xlu0 %448
        %450 = vrot.lane.b32.xlu0 %v441, 17
        %v451 = vpop.permute.xlu0 %450
        %v452 = vsel %vm442, %v449, %v451
        %456 = vst.msk [vmem:[#allocation2] sm:$0xff] %vm444, %v449
        %457 = vst [vmem:[#allocation2 + $0x8] sm:$0xff] %v452
        %458 = vst.msk [vmem:[#allocation2 + $0x10] sm:$0xff] %vm442, %v451
        %v459 = vlaneseq
        %v460 = vand.u32 %v459, 127
        %v461 = vadd.s32 %v460, 128
        %vm462 = vcmp.lt.s32.totalorder %v460, 0
        %v463 = vsub.s32 0, %v460
        %v464 = vsel %vm462, %v463, %v460
        %v465 = vshrl.u32 %v464, 4
        %v466 = vand.u32 %v464, 15
        %v467 = vsub.s32 0, %v466
        %v468 = vsel %vm462, %v467, %v466
        %vm469 = vcmp.lt.s32.totalorder %v461, 0
        %v470 = vsub.s32 0, %v461
        %v471 = vsel %vm469, %v470, %v461
        %v472 = vshrl.u32 %v471, 4
        %v473 = vand.u32 %v471, 15
        %v474 = vsub.s32 0, %v473
        %v475 = vsel %vm469, %v474, %v473
        %vm476 = vcmp.ne.s32.totalorder %v468, 0
        %vm477 = vcmp.ne.s32.totalorder %v475, 0
        %vm478 = vcmp.lt.s32.totalorder %v468, 0
        %vm479 = vcmp.lt.s32.totalorder %v475, 0
        %vm480 = vmand %vm478, %vm476
        %vm481 = vmand %vm479, %vm477
        %v482 = vadd.s32 %v468, 16
        %v483 = vadd.s32 %v475, 16
        %v484 = vsel %vm480, %v482, %v468
        %v485 = vsel %vm481, %v483, %v475
        %v486 = vld [vmem:[#allocation2] sm:$0xff]
        %v487 = vld [vmem:[#allocation2 + $0x8] sm:$0xff]
        %v488 = vadd.s32 %v484, 4294967295
        %v489 = vadd.s32 %v485, 4294967295
        %vm490 = vcmp.ge.s32.totalorder %v488, 0
        %vm491 = vcmp.ge.s32.totalorder %v489, 0
        %vm492 = vcmp.lt.s32.totalorder %v488, 16
        %vm493 = vcmp.lt.s32.totalorder %v489, 16
        %vm494 = vmand %vm490, %vm492
        %vm495 = vmand %vm491, %vm493
        %v496 = vsel %vm494, 1, 0
        %v497 = vsel %vm495, 1, 0
        %vm498 = vcmp.eq.s32.totalorder %v496, 1
        %vm499 = vcmp.eq.s32.totalorder %v497, 1
        %v500 = vsel %vm498, %v486, 0.0
        %v501 = vsel %vm499, %v487, 0.0
        %v502 = vpack.c.bf16 %v501, %v500
        %503 = vst [vmem:[#allocation3] sm:$0xff] %v502
        %v504 = vld [vmem:[#allocation2] sm:$0xff]
        %v505 = vld [vmem:[#allocation2 + $0x8] sm:$0xff]
        %v506 = vld [vmem:[#allocation2 + $0x10] sm:$0xff]
        %vm507 = vcmp.ge.s32.totalorder %v484, 0
        %vm508 = vcmp.ge.s32.totalorder %v485, 0
        %vm509 = vcmp.lt.s32.totalorder %v484, 16
        %vm510 = vcmp.lt.s32.totalorder %v485, 16
        %vm511 = vmand %vm507, %vm509
        %vm512 = vmand %vm508, %vm510
        %v513 = vsel %vm511, 1, 0
        %v514 = vsel %vm512, 1, 0
        %vm515 = vcmp.eq.s32.totalorder %v513, 1
        %vm516 = vcmp.eq.s32.totalorder %v514, 1
        %520 = vrot.lane.b32.xlu0 %v504, 127
        %v521 = vpop.permute.xlu0 %520
        %522 = vrot.lane.b32.xlu0 %v505, 127
        %v523 = vpop.permute.xlu0 %522
        %524 = vrot.lane.b32.xlu0 %v506, 127
        %v525 = vpop.permute.xlu0 %524
        %vm526 = vcmask 1039360
        %v527 = vsel %vm526, %v521, %v523
        %v528 = vsel %vm526, %v523, %v525
        %v531 = vsel %vm515, %v527, 0.0
        %v532 = vsel %vm516, %v528, 0.0
        %v533 = vpack.c.bf16 %v532, %v531
        %534 = vst [vmem:[#allocation3 + $0x8] sm:$0xff] %v533
        %v535 = vld [vmem:[#allocation2] sm:$0xff]
        %v536 = vld [vmem:[#allocation2 + $0x8] sm:$0xff]
        %v537 = vld [vmem:[#allocation2 + $0x10] sm:$0xff]
        %v538 = vadd.s32 %v484, 1
        %v539 = vadd.s32 %v485, 1
        %vm540 = vcmp.ge.s32.totalorder %v538, 0
        %vm541 = vcmp.ge.s32.totalorder %v539, 0
        %vm542 = vcmp.lt.s32.totalorder %v538, 16
        %vm543 = vcmp.lt.s32.totalorder %v539, 16
        %vm544 = vmand %vm540, %vm542
        %vm545 = vmand %vm541, %vm543
        %v546 = vsel %vm544, 1, 0
        %v547 = vsel %vm545, 1, 0
        %vm548 = vcmp.eq.s32.totalorder %v546, 1
        %vm549 = vcmp.eq.s32.totalorder %v547, 1
        %553 = vrot.lane.b32.xlu0 %v535, 126
        %v554 = vpop.permute.xlu0 %553
        %555 = vrot.lane.b32.xlu0 %v536, 126
        %v556 = vpop.permute.xlu0 %555
        %557 = vrot.lane.b32.xlu0 %v537, 126
        %v558 = vpop.permute.xlu0 %557
        %vm559 = vcmask 1031168
        %v560 = vsel %vm559, %v554, %v556
        %v561 = vsel %vm559, %v556, %v558
        %v564 = vsel %vm548, %v560, 0.0
        %v565 = vsel %vm549, %v561, 0.0
        %v566 = vpack.c.bf16 %v565, %v564
        %567 = vst [vmem:[#allocation3 + $0x10] sm:$0xff] %v566
        %v568 = vld [vmem:[#allocation2] sm:$0xff]
        %v569 = vld [vmem:[#allocation2 + $0x8] sm:$0xff]
        %v570 = vld [vmem:[#allocation2 + $0x10] sm:$0xff]
        %574 = vrot.lane.b32.xlu0 %v568, 112
        %v575 = vpop.permute.xlu0 %574
        %576 = vrot.lane.b32.xlu0 %v569, 112
        %v577 = vpop.permute.xlu0 %576
        %578 = vrot.lane.b32.xlu0 %v570, 112
        %v579 = vpop.permute.xlu0 %578
        %vm580 = vcmask 916480
        %v581 = vsel %vm580, %v575, %v577
        %v582 = vsel %vm580, %v577, %v579
        %v585 = vsel %vm498, %v581, 0.0
        %v586 = vsel %vm499, %v582, 0.0
        %v587 = vpack.c.bf16 %v586, %v585
        %588 = vst [vmem:[#allocation3 + $0x18] sm:$0xff] %v587
        %v589 = vld [vmem:[#allocation2] sm:$0xff]
        %v590 = vld [vmem:[#allocation2 + $0x8] sm:$0xff]
        %v591 = vld [vmem:[#allocation2 + $0x10] sm:$0xff]
        %595 = vrot.lane.b32.xlu0 %v589, 111
        %v596 = vpop.permute.xlu0 %595
        %597 = vrot.lane.b32.xlu0 %v590, 111
        %v598 = vpop.permute.xlu0 %597
        %599 = vrot.lane.b32.xlu0 %v591, 111
        %v600 = vpop.permute.xlu0 %599
        %vm601 = vcmask 908288
        %v602 = vsel %vm601, %v596, %v598
        %v603 = vsel %vm601, %v598, %v600
        %v606 = vsel %vm515, %v602, 0.0
        %v607 = vsel %vm516, %v603, 0.0
        %v608 = vpack.c.bf16 %v607, %v606
        %609 = vst [vmem:[#allocation3 + $0x20] sm:$0xff] %v608
        %v610 = vld [vmem:[#allocation2] sm:$0xff]
        %v611 = vld [vmem:[#allocation2 + $0x8] sm:$0xff]
        %v612 = vld [vmem:[#allocation2 + $0x10] sm:$0xff]
        %616 = vrot.lane.b32.xlu0 %v610, 110
        %v617 = vpop.permute.xlu0 %616
        %618 = vrot.lane.b32.xlu0 %v611, 110
        %v619 = vpop.permute.xlu0 %618
        %620 = vrot.lane.b32.xlu0 %v612, 110
        %v621 = vpop.permute.xlu0 %620
        %vm622 = vcmask 900096
        %v623 = vsel %vm622, %v617, %v619
        %v624 = vsel %vm622, %v619, %v621
        %v627 = vsel %vm548, %v623, 0.0
        %v628 = vsel %vm549, %v624, 0.0
        %v629 = vpack.c.bf16 %v628, %v627
        %630 = vst [vmem:[#allocation3 + $0x28] sm:$0xff] %v629
        %v631 = vld [vmem:[#allocation2] sm:$0xff]
        %v632 = vld [vmem:[#allocation2 + $0x8] sm:$0xff]
        %v633 = vld [vmem:[#allocation2 + $0x10] sm:$0xff]
        %637 = vrot.lane.b32.xlu0 %v631, 96
        %v638 = vpop.permute.xlu0 %637
        %639 = vrot.lane.b32.xlu0 %v632, 96
        %v640 = vpop.permute.xlu0 %639
        %641 = vrot.lane.b32.xlu0 %v633, 96
        %v642 = vpop.permute.xlu0 %641
        %vm643 = vcmask 785408
        %v644 = vsel %vm643, %v638, %v640
        %v645 = vsel %vm643, %v640, %v642
        %v648 = vsel %vm498, %v644, 0.0
        %v649 = vsel %vm499, %v645, 0.0
        %v650 = vpack.c.bf16 %v649, %v648
        %651 = vst [vmem:[#allocation3 + $0x30] sm:$0xff] %v650
        %v652 = vld [vmem:[#allocation2] sm:$0xff]
        %v653 = vld [vmem:[#allocation2 + $0x8] sm:$0xff]
        %v654 = vld [vmem:[#allocation2 + $0x10] sm:$0xff]
        %658 = vrot.lane.b32.xlu0 %v652, 95
        %v659 = vpop.permute.xlu0 %658
        %660 = vrot.lane.b32.xlu0 %v653, 95
        %v661 = vpop.permute.xlu0 %660
        %662 = vrot.lane.b32.xlu0 %v654, 95
        %v663 = vpop.permute.xlu0 %662
        %vm664 = vcmask 777216
        %v665 = vsel %vm664, %v659, %v661
        %v666 = vsel %vm664, %v661, %v663
        %v669 = vsel %vm515, %v665, 0.0
        %v670 = vsel %vm516, %v666, 0.0
        %v671 = vpack.c.bf16 %v670, %v669
        %672 = vst [vmem:[#allocation3 + $0x38] sm:$0xff] %v671
        %v673 = vld [vmem:[#allocation2] sm:$0xff]
        %v674 = vld [vmem:[#allocation2 + $0x8] sm:$0xff]
        %v675 = vld [vmem:[#allocation2 + $0x10] sm:$0xff]
        %679 = vrot.lane.b32.xlu0 %v673, 94
        %v680 = vpop.permute.xlu0 %679
        %681 = vrot.lane.b32.xlu0 %v674, 94
        %v682 = vpop.permute.xlu0 %681
        %683 = vrot.lane.b32.xlu0 %v675, 94
        %v684 = vpop.permute.xlu0 %683
        %vm685 = vcmask 769024
        %v686 = vsel %vm685, %v680, %v682
        %v687 = vsel %vm685, %v682, %v684
        %v690 = vsel %vm548, %v686, 0.0
        %v691 = vsel %vm549, %v687, 0.0
        %v692 = vpack.c.bf16 %v691, %v690
        %693 = vst [vmem:[#allocation3 + $0x40] sm:$0xff] %v692
        %v694 = vld [vmem:[%s1] sm:$0xf]
        %v695 = vld [vmem:[%s1 + $0x4] sm:$0xf]
        %v696 = vld [vmem:[#allocation3] sm:$0xff]
        %v697 = vld [vmem:[#allocation3 + $0x8] sm:$0xff]
        %v698 = vld [vmem:[#allocation3 + $0x10] sm:$0xff]
        %v699 = vld [vmem:[#allocation3 + $0x18] sm:$0xff]
        %v700 = vld [vmem:[#allocation3 + $0x20] sm:$0xff]
        %v701 = vld [vmem:[#allocation3 + $0x28] sm:$0xff]
        %v702 = vld [vmem:[#allocation3 + $0x30] sm:$0xff]
        %v703 = vld [vmem:[#allocation3 + $0x38] sm:$0xff]
        %v704 = vld [vmem:[#allocation3 + $0x40] sm:$0xff]
        %v705 = vld [vmem:[%s2] sm:$0xff]
        %v706 = vld [vmem:[%s2 + $0x8] sm:$0xff]
        %708 = vset.pattern.permute.xlu0 0
        %709 = vperm.xlu0 %708, %v705
        %v710 = vpop.permute.xlu0 %709
        %713 = vset.pattern.permute.xlu0 0
        %714 = vperm.xlu0 %713, %v706
        %v715 = vpop.permute.xlu0 %714
        %v719 = vunpack.c.l.b16 %v694
        %v720 = vunpack.c.l.b16 %v695
        %v721 = vpack.c.b16 %v720, %v719
        %v731 = vunpack.c.l.b16 %v696
        %v732 = vunpack.c.h.b16 %v696
        %v733 = vunpack.c.l.b16 %v697
        %v734 = vunpack.c.h.b16 %v697
        %v735 = vunpack.c.l.b16 %v698
        %v736 = vunpack.c.h.b16 %v698
        %v737 = vunpack.c.l.b16 %v699
        %v738 = vunpack.c.h.b16 %v699
        %v739 = vunpack.c.l.b16 %v700
        %v740 = vunpack.c.h.b16 %v700
        %v741 = vunpack.c.l.b16 %v701
        %v742 = vunpack.c.h.b16 %v701
        %v743 = vunpack.c.l.b16 %v702
        %v744 = vunpack.c.h.b16 %v702
        %v745 = vunpack.c.l.b16 %v703
        %v746 = vunpack.c.h.b16 %v703
        %v747 = vunpack.c.l.b16 %v704
        %v748 = vunpack.c.h.b16 %v704
        %v749 = vpack.c.b16 %v733, %v731
        %v750 = vpack.c.b16 %v734, %v732
        %v751 = vpack.c.b16 %v737, %v735
        %v752 = vpack.c.b16 %v738, %v736
        %v753 = vpack.c.b16 %v741, %v739
        %v754 = vpack.c.b16 %v742, %v740
        %v755 = vpack.c.b16 %v745, %v743
        %v756 = vpack.c.b16 %v746, %v744
        %v757 = vpack.c.b16 %v747, %v747
        %v758 = vpack.c.b16 %v748, %v748
        %vm767 = vcmask 588800
        %v769 = vsel %vm767, %v721, 0
        %vm771 = vcmask 1043456
        %v773 = vsel %vm771, %v757, 0
        %v776 = vsel %vm771, %v758, 0
        %778 = vmatpush.bf16.msra.mxu0 0
        %779 = vmatpush.bf16.msra.mxu0 0
        %780 = vmatpush.bf16.msra.mxu0 0
        %781 = vmatpush.bf16.msra.mxu0 %v773
        %782 = vmatpush.bf16.msra.mxu0 %v755
        %783 = vmatpush.bf16.msra.mxu0 %v753
        %784 = vmatpush.bf16.msra.mxu0 %v751
        %785 = vmatpush.bf16.msra.mxu0 %v749
        %786 = vmatmul.bf16.gmra.mxu0 %v769
        %v787 = vpop.f32.mrf.mxu0
        %v788 = vadd.f32 %v710, %v787
        %v789 = vpop.f32.mrf.mxu0
        %v790 = vadd.f32 %v715, %v789
        %791 = vdwg.mxu0
        %792 = vmatpush.bf16.msra.mxu0 0
        %793 = vmatpush.bf16.msra.mxu0 0
        %794 = vmatpush.bf16.msra.mxu0 0
        %795 = vmatpush.bf16.msra.mxu0 %v776
        %796 = vmatpush.bf16.msra.mxu0 %v756
        %797 = vmatpush.bf16.msra.mxu0 %v754
        %798 = vmatpush.bf16.msra.mxu0 %v752
        %799 = vmatpush.bf16.msra.mxu0 %v750
        %800 = vmatmul.bf16.gmra.mxu0 %v769
        %v801 = vpop.f32.mrf.mxu0
        %v802 = vadd.f32 %v710, %v801
        %v803 = vpop.f32.mrf.mxu0
        %v804 = vadd.f32 %v715, %v803
        %805 = vdwg.mxu0
        %v806 = vmax.f32 %v788, 0.0
        %v807 = vmax.f32 %v802, 0.0
        %v808 = vmax.f32 %v790, 0.0
        %v809 = vmax.f32 %v804, 0.0
        %810 = vst [vmem:[#allocation4 + $0x10] sm:$0xff] 0.0
        %811 = vst [vmem:[#allocation4 + $0x28] sm:$0xff] 0.0
        %812 = vst [vmem:[#allocation4] sm:$0xff] %v806
        %813 = vst [vmem:[#allocation4 + $0x8] sm:$0xff] %v807
        %814 = vst [vmem:[#allocation4 + $0x18] sm:$0xff] %v808
        %815 = vst [vmem:[#allocation4 + $0x20] sm:$0xff] %v809
        %v816 = vld [vmem:[#allocation4] sm:$0xff]
        %v817 = vld [vmem:[#allocation4 + $0x8] sm:$0xff]
        %v818 = vld [vmem:[#allocation4 + $0x10] sm:$0xff]
        %v819 = vld [vmem:[#allocation4 + $0x18] sm:$0xff]
        %v820 = vld [vmem:[#allocation4 + $0x20] sm:$0xff]
        %v821 = vld [vmem:[#allocation4 + $0x28] sm:$0xff]
        %828 = vrot.lane.b32.xlu0 %v816, 127
        %v829 = vpop.permute.xlu0 %828
        %830 = vrot.lane.b32.xlu0 %v817, 127
        %v831 = vpop.permute.xlu0 %830
        %832 = vrot.lane.b32.xlu0 %v818, 127
        %v833 = vpop.permute.xlu0 %832
        %834 = vrot.lane.b32.xlu0 %v819, 127
        %v835 = vpop.permute.xlu0 %834
        %836 = vrot.lane.b32.xlu0 %v820, 127
        %v837 = vpop.permute.xlu0 %836
        %838 = vrot.lane.b32.xlu0 %v821, 127
        %v839 = vpop.permute.xlu0 %838
        %v840 = vsel %vm526, %v829, %v831
        %v841 = vsel %vm526, %v831, %v833
        %v842 = vsel %vm526, %v835, %v837
        %v843 = vsel %vm526, %v837, %v839
        %v848 = vmax.f32 %v806, %v840
        %v849 = vmax.f32 %v807, %v841
        %v850 = vmax.f32 %v808, %v842
        %v851 = vmax.f32 %v809, %v843
        %v854 = vmax.f32 %v816, %v840
        %v855 = vmax.f32 %v817, %v841
        %v856 = vmax.f32 %v818, %v833
        %v857 = vmax.f32 %v819, %v842
        %v858 = vmax.f32 %v820, %v843
        %v859 = vmax.f32 %v821, %v839
        %866 = vrot.lane.b32.xlu0 %v854, 112
        %v867 = vpop.permute.xlu0 %866
        %868 = vrot.lane.b32.xlu0 %v855, 112
        %v869 = vpop.permute.xlu0 %868
        %870 = vrot.lane.b32.xlu0 %v856, 112
        %v871 = vpop.permute.xlu0 %870
        %872 = vrot.lane.b32.xlu0 %v857, 112
        %v873 = vpop.permute.xlu0 %872
        %874 = vrot.lane.b32.xlu0 %v858, 112
        %v875 = vpop.permute.xlu0 %874
        %876 = vrot.lane.b32.xlu0 %v859, 112
        %v877 = vpop.permute.xlu0 %876
        %v878 = vsel %vm580, %v867, %v869
        %v879 = vsel %vm580, %v869, %v871
        %v880 = vsel %vm580, %v873, %v875
        %v881 = vsel %vm580, %v875, %v877
        %v886 = vmax.f32 %v848, %v878
        %v887 = vmax.f32 %v849, %v879
        %v888 = vmax.f32 %v850, %v880
        %v889 = vmax.f32 %v851, %v881
        %v890 = vld [vmem:[%s3] sm:$0xff]
        %v891 = vld [vmem:[%s3 + $0x8] sm:$0xff]
        %v892 = vld [vmem:[%s3 + $0x10] sm:$0xff]
        %v893 = vld [vmem:[%s3 + $0x18] sm:$0xff]
        %v894 = vld [vmem:[%s3 + $0x20] sm:$0xff]
        %v895 = vld [vmem:[%s3 + $0x28] sm:$0xff]
        %v896 = vld [vmem:[%s3 + $0x30] sm:$0xff]
        %v897 = vld [vmem:[%s3 + $0x38] sm:$0xff]
        %v898 = vld [vmem:[%s3 + $0x40] sm:$0xff]
        %v899 = vld [vmem:[%s3 + $0x48] sm:$0xff]
        %v900 = vld [vmem:[%s3 + $0x50] sm:$0xff]
        %v901 = vld [vmem:[%s3 + $0x58] sm:$0xff]
        %v902 = vld [vmem:[%s3 + $0x60] sm:$0xff]
        %v903 = vld [vmem:[%s3 + $0x68] sm:$0xff]
        %v904 = vld [vmem:[%s3 + $0x70] sm:$0xff]
        %v905 = vld [vmem:[%s3 + $0x78] sm:$0xff]
        %v906 = vld [vmem:[%s3 + $0x80] sm:$0xff]
        %v907 = vld [vmem:[%s3 + $0x88] sm:$0xff]
        %v908 = vld [vmem:[%s3 + $0x90] sm:$0xff]
        %v909 = vld [vmem:[%s3 + $0x98] sm:$0xff]
        %v910 = vld [vmem:[%s3 + $0xa0] sm:$0xff]
        %v911 = vld [vmem:[%s3 + $0xa8] sm:$0xff]
        %v912 = vld [vmem:[%s3 + $0xb0] sm:$0xff]
        %v913 = vld [vmem:[%s3 + $0xb8] sm:$0xff]
        %v914 = vld [vmem:[%s3 + $0xc0] sm:$0xff]
        %v915 = vld [vmem:[%s3 + $0xc8] sm:$0xff]
        %v916 = vld [vmem:[%s3 + $0xd0] sm:$0xff]
        %v917 = vld [vmem:[%s3 + $0xd8] sm:$0xff]
        %v918 = vld [vmem:[%s3 + $0xe0] sm:$0xff]
        %v919 = vld [vmem:[%s3 + $0xe8] sm:$0xff]
        %v920 = vld [vmem:[%s3 + $0xf0] sm:$0xff]
        %v921 = vld [vmem:[%s3 + $0xf8] sm:$0xff]
        %922 = vmatpush.msra.mxu0 %v905
        %923 = vmatpush.msra.mxu0 %v904
        %924 = vmatpush.msra.mxu0 %v903
        %925 = vmatpush.msra.mxu0 %v902
        %926 = vmatpush.msra.mxu0 %v901
        %927 = vmatpush.msra.mxu0 %v900
        %928 = vmatpush.msra.mxu0 %v899
        %929 = vmatpush.msra.mxu0 %v898
        %930 = vmatpush.msra.mxu0 %v897
        %931 = vmatpush.msra.mxu0 %v896
        %932 = vmatpush.msra.mxu0 %v895
        %933 = vmatpush.msra.mxu0 %v894
        %934 = vmatpush.msra.mxu0 %v893
        %935 = vmatpush.msra.mxu0 %v892
        %936 = vmatpush.msra.mxu0 %v891
        %937 = vmatpush.msra.mxu0 %v890
        %938 = vmatmul.f32.gmra.mxu0 %v886
        %v939 = vpop.f32.mrf.mxu0
        %v940 = vadd.f32 0.0, %v939
        %941 = vmatmul.f32.gmra.mxu0 %v888
        %v942 = vpop.f32.mrf.mxu0
        %v943 = vadd.f32 0.0, %v942
        %944 = vdwg.mxu0
        %945 = vmatpush.msra.mxu0 %v921
        %946 = vmatpush.msra.mxu0 %v920
        %947 = vmatpush.msra.mxu0 %v919
        %948 = vmatpush.msra.mxu0 %v918
        %949 = vmatpush.msra.mxu0 %v917
        %950 = vmatpush.msra.mxu0 %v916
        %951 = vmatpush.msra.mxu0 %v915
        %952 = vmatpush.msra.mxu0 %v914
        %953 = vmatpush.msra.mxu0 %v913
        %954 = vmatpush.msra.mxu0 %v912
        %955 = vmatpush.msra.mxu0 %v911
        %956 = vmatpush.msra.mxu0 %v910
        %957 = vmatpush.msra.mxu0 %v909
        %958 = vmatpush.msra.mxu0 %v908
        %959 = vmatpush.msra.mxu0 %v907
        %960 = vmatpush.msra.mxu0 %v906
        %961 = vmatmul.f32.gmra.mxu0 %v887
        %v962 = vpop.f32.mrf.mxu0
        %v963 = vadd.f32 %v940, %v962
        %964 = vmatmul.f32.gmra.mxu0 %v889
        %v965 = vpop.f32.mrf.mxu0
        %v966 = vadd.f32 %v943, %v965
        %967 = vdwg.mxu0
        %vm968 = vcmask 72704
        %969 = vst.msk [vmem:[#allocation5] sm:$0xff] %vm968, 0.0
        %970 = vst.msk [vmem:[#allocation5 + $0x8] sm:$0xff] %vm968, 0.0
        %vm971 = vcmask 1048136
        %972 = vst.msk [vmem:[#allocation5] sm:$0xff] %vm971, 0.0
        %973 = vst.msk [vmem:[#allocation5 + $0x8] sm:$0xff] %vm971, 0.0
        %976 = vrot.lane.b32.xlu0 %v963, 9
        %v977 = vpop.permute.xlu0 %976
        %978 = vrot.lane.b32.xlu0 %v966, 9
        %v979 = vpop.permute.xlu0 %978
        %vm982 = vcmask 597064
        %983 = vst.msk [vmem:[#allocation5] sm:$0xff] %vm982, %v977
        %984 = vst.msk [vmem:[#allocation5 + $0x8] sm:$0xff] %vm982, %v979
        %vm985 = vcmp.lt.s32.totalorder %v460, 0
        %v986 = vsub.s32 0, %v460
        %v987 = vsel %vm985, %v986, %v460
        %v988 = vshrl.u32 %v987, 3
        %v989 = vand.u32 %v987, 7
        %v990 = vsub.s32 0, %v989
        %v991 = vsel %vm985, %v990, %v989
        %vm992 = vcmp.ne.s32.totalorder %v991, 0
        %vm993 = vcmp.lt.s32.totalorder %v991, 0
        %vm994 = vmand %vm993, %vm992
        %v995 = vadd.s32 %v991, 8
        %v996 = vsel %vm994, %v995, %v991
        %v997 = vld [vmem:[#allocation5] sm:$0xff]
        %v998 = vld [vmem:[#allocation5 + $0x8] sm:$0xff]
        %v999 = vadd.s32 %v996, 4294967295
        %vm1000 = vcmp.ge.s32.totalorder %v999, 0
        %vm1001 = vcmp.lt.s32.totalorder %v999, 8
        %vm1002 = vmand %vm1000, %vm1001
        %v1003 = vsel %vm1002, 1, 0
        %vm1004 = vcmp.eq.s32.totalorder %v1003, 1
        %v1005 = vsel %vm1004, %v997, 0.0
        %v1006 = vsel %vm1004, %v998, 0.0
        %v1007 = vpack.c.bf16 %v1005, %v1005
        %v1008 = vpack.c.bf16 %v1006, %v1006
        %vm1009 = vcmask 519168
        %1010 = vst.msk [vmem:[#allocation6] sm:$0xf] %vm1009, %v1007
        %1011 = vst.msk [vmem:[#allocation6 + $0x4] sm:$0xf] %vm1009, %v1008
        %v1012 = vld [vmem:[#allocation5] sm:$0xff]
        %v1013 = vld [vmem:[#allocation5 + $0x8] sm:$0xff]
        %vm1014 = vcmp.ge.s32.totalorder %v996, 0
        %vm1015 = vcmp.lt.s32.totalorder %v996, 8
        %vm1016 = vmand %vm1014, %vm1015
        %v1017 = vsel %vm1016, 1, 0
        %vm1018 = vcmp.eq.s32.totalorder %v1017, 1
        %1021 = vrot.lane.b32.xlu0 %v1012, 127
        %v1022 = vpop.permute.xlu0 %1021
        %1023 = vrot.lane.b32.xlu0 %v1013, 127
        %v1024 = vpop.permute.xlu0 %1023
        %v1027 = vsel %vm1018, %v1022, 0.0
        %v1028 = vsel %vm1018, %v1024, 0.0
        %v1029 = vpack.c.bf16 %v1027, %v1027
        %v1030 = vpack.c.bf16 %v1028, %v1028
        %1031 = vst.msk [vmem:[#allocation6 + $0x8] sm:$0xf] %vm1009, %v1029
        %1032 = vst.msk [vmem:[#allocation6 + $0xc] sm:$0xf] %vm1009, %v1030
        %v1033 = vld [vmem:[#allocation5] sm:$0xff]
        %v1034 = vld [vmem:[#allocation5 + $0x8] sm:$0xff]
        %v1035 = vadd.s32 %v996, 1
        %vm1036 = vcmp.ge.s32.totalorder %v1035, 0
        %vm1037 = vcmp.lt.s32.totalorder %v1035, 8
        %vm1038 = vmand %vm1036, %vm1037
        %v1039 = vsel %vm1038, 1, 0
        %vm1040 = vcmp.eq.s32.totalorder %v1039, 1
        %1043 = vrot.lane.b32.xlu0 %v1033, 126
        %v1044 = vpop.permute.xlu0 %1043
        %1045 = vrot.lane.b32.xlu0 %v1034, 126
        %v1046 = vpop.permute.xlu0 %1045
        %v1049 = vsel %vm1040, %v1044, 0.0
        %v1050 = vsel %vm1040, %v1046, 0.0
        %v1051 = vpack.c.bf16 %v1049, %v1049
        %v1052 = vpack.c.bf16 %v1050, %v1050
        %1053 = vst.msk [vmem:[#allocation6 + $0x10] sm:$0xf] %vm1009, %v1051
        %1054 = vst.msk [vmem:[#allocation6 + $0x14] sm:$0xf] %vm1009, %v1052
        %v1055 = vld [vmem:[#allocation5] sm:$0xff]
        %v1056 = vld [vmem:[#allocation5 + $0x8] sm:$0xff]
        %1059 = vrot.lane.b32.xlu0 %v1055, 120
        %v1060 = vpop.permute.xlu0 %1059
        %1061 = vrot.lane.b32.xlu0 %v1056, 120
        %v1062 = vpop.permute.xlu0 %1061
        %v1065 = vsel %vm1004, %v1060, 0.0
        %v1066 = vsel %vm1004, %v1062, 0.0
        %v1067 = vpack.c.bf16 %v1065, %v1065
        %v1068 = vpack.c.bf16 %v1066, %v1066
        %1069 = vst.msk [vmem:[#allocation6 + $0x18] sm:$0xf] %vm1009, %v1067
        %1070 = vst.msk [vmem:[#allocation6 + $0x1c] sm:$0xf] %vm1009, %v1068
        %v1071 = vld [vmem:[#allocation5] sm:$0xff]
        %v1072 = vld [vmem:[#allocation5 + $0x8] sm:$0xff]
        %1075 = vrot.lane.b32.xlu0 %v1071, 119
        %v1076 = vpop.permute.xlu0 %1075
        %1077 = vrot.lane.b32.xlu0 %v1072, 119
        %v1078 = vpop.permute.xlu0 %1077
        %v1081 = vsel %vm1018, %v1076, 0.0
        %v1082 = vsel %vm1018, %v1078, 0.0
        %v1083 = vpack.c.bf16 %v1081, %v1081
        %v1084 = vpack.c.bf16 %v1082, %v1082
        %1085 = vst.msk [vmem:[#allocation6 + $0x20] sm:$0xf] %vm1009, %v1083
        %1086 = vst.msk [vmem:[#allocation6 + $0x24] sm:$0xf] %vm1009, %v1084
        %v1087 = vld [vmem:[#allocation5] sm:$0xff]
        %v1088 = vld [vmem:[#allocation5 + $0x8] sm:$0xff]
        %1091 = vrot.lane.b32.xlu0 %v1087, 118
        %v1092 = vpop.permute.xlu0 %1091
        %1093 = vrot.lane.b32.xlu0 %v1088, 118
        %v1094 = vpop.permute.xlu0 %1093
        %v1097 = vsel %vm1040, %v1092, 0.0
        %v1098 = vsel %vm1040, %v1094, 0.0
        %v1099 = vpack.c.bf16 %v1097, %v1097
        %v1100 = vpack.c.bf16 %v1098, %v1098
        %1101 = vst.msk [vmem:[#allocation6 + $0x28] sm:$0xf] %vm1009, %v1099
        %1102 = vst.msk [vmem:[#allocation6 + $0x2c] sm:$0xf] %vm1009, %v1100
        %v1103 = vld [vmem:[#allocation5] sm:$0xff]
        %v1104 = vld [vmem:[#allocation5 + $0x8] sm:$0xff]
        %1107 = vrot.lane.b32.xlu0 %v1103, 112
        %v1108 = vpop.permute.xlu0 %1107
        %1109 = vrot.lane.b32.xlu0 %v1104, 112
        %v1110 = vpop.permute.xlu0 %1109
        %v1113 = vsel %vm1004, %v1108, 0.0
        %v1114 = vsel %vm1004, %v1110, 0.0
        %v1115 = vpack.c.bf16 %v1113, %v1113
        %v1116 = vpack.c.bf16 %v1114, %v1114
        %1117 = vst.msk [vmem:[#allocation6 + $0x30] sm:$0xf] %vm1009, %v1115
        %1118 = vst.msk [vmem:[#allocation6 + $0x34] sm:$0xf] %vm1009, %v1116
        %v1119 = vld [vmem:[#allocation5] sm:$0xff]
        %v1120 = vld [vmem:[#allocation5 + $0x8] sm:$0xff]
        %1123 = vrot.lane.b32.xlu0 %v1119, 111
        %v1124 = vpop.permute.xlu0 %1123
        %1125 = vrot.lane.b32.xlu0 %v1120, 111
        %v1126 = vpop.permute.xlu0 %1125
        %v1129 = vsel %vm1018, %v1124, 0.0
        %v1130 = vsel %vm1018, %v1126, 0.0
        %v1131 = vpack.c.bf16 %v1129, %v1129
        %v1132 = vpack.c.bf16 %v1130, %v1130
        %1133 = vst.msk [vmem:[#allocation6 + $0x38] sm:$0xf] %vm1009, %v1131
        %1134 = vst.msk [vmem:[#allocation6 + $0x3c] sm:$0xf] %vm1009, %v1132
        %v1135 = vld [vmem:[#allocation5] sm:$0xff]
        %v1136 = vld [vmem:[#allocation5 + $0x8] sm:$0xff]
        %1139 = vrot.lane.b32.xlu0 %v1135, 110
        %v1140 = vpop.permute.xlu0 %1139
        %1141 = vrot.lane.b32.xlu0 %v1136, 110
        %v1142 = vpop.permute.xlu0 %1141
        %v1145 = vsel %vm1040, %v1140, 0.0
        %v1146 = vsel %vm1040, %v1142, 0.0
        %v1147 = vpack.c.bf16 %v1145, %v1145
        %v1148 = vpack.c.bf16 %v1146, %v1146
        %1149 = vst.msk [vmem:[#allocation6 + $0x40] sm:$0xf] %vm1009, %v1147
        %1150 = vst.msk [vmem:[#allocation6 + $0x44] sm:$0xf] %vm1009, %v1148
        %v1151 = vld [vmem:[%s4] sm:$0xff]
        %v1152 = vld [vmem:[%s4 + $0x8] sm:$0xff]
        %v1153 = vld [vmem:[%s4 + $0x10] sm:$0xff]
        %v1154 = vld [vmem:[%s4 + $0x18] sm:$0xff]
        %v1155 = vld [vmem:[#allocation6] sm:$0xf]
        %v1156 = vld [vmem:[#allocation6 + $0x4] sm:$0xf]
        %v1157 = vld [vmem:[#allocation6 + $0x8] sm:$0xf]
        %v1158 = vld [vmem:[#allocation6 + $0xc] sm:$0xf]
        %v1159 = vld [vmem:[#allocation6 + $0x10] sm:$0xf]
        %v1160 = vld [vmem:[#allocation6 + $0x14] sm:$0xf]
        %v1161 = vld [vmem:[#allocation6 + $0x18] sm:$0xf]
        %v1162 = vld [vmem:[#allocation6 + $0x1c] sm:$0xf]
        %v1163 = vld [vmem:[#allocation6 + $0x20] sm:$0xf]
        %v1164 = vld [vmem:[#allocation6 + $0x24] sm:$0xf]
        %v1165 = vld [vmem:[#allocation6 + $0x28] sm:$0xf]
        %v1166 = vld [vmem:[#allocation6 + $0x2c] sm:$0xf]
        %v1167 = vld [vmem:[#allocation6 + $0x30] sm:$0xf]
        %v1168 = vld [vmem:[#allocation6 + $0x34] sm:$0xf]
        %v1169 = vld [vmem:[#allocation6 + $0x38] sm:$0xf]
        %v1170 = vld [vmem:[#allocation6 + $0x3c] sm:$0xf]
        %v1171 = vld [vmem:[#allocation6 + $0x40] sm:$0xf]
        %v1172 = vld [vmem:[#allocation6 + $0x44] sm:$0xf]
        %v1173 = vld [vmem:[%s5] sm:$0xff]
        %v1174 = vld [vmem:[%s5 + $0x8] sm:$0xff]
        %v1175 = vld [vmem:[%s5 + $0x10] sm:$0xff]
        %v1176 = vld [vmem:[%s5 + $0x18] sm:$0xff]
        %1178 = vset.pattern.permute.xlu0 0
        %1179 = vperm.xlu0 %1178, %v1173
        %v1180 = vpop.permute.xlu0 %1179
        %1183 = vset.pattern.permute.xlu0 0
        %1184 = vperm.xlu0 %1183, %v1174
        %v1185 = vpop.permute.xlu0 %1184
        %1188 = vset.pattern.permute.xlu0 0
        %1189 = vperm.xlu0 %1188, %v1175
        %v1190 = vpop.permute.xlu0 %1189
        %1193 = vset.pattern.permute.xlu0 0
        %1194 = vperm.xlu0 %1193, %v1176
        %v1195 = vpop.permute.xlu0 %1194
        %v1201 = vunpack.c.l.b16 %v1151
        %v1202 = vunpack.c.h.b16 %v1151
        %v1203 = vunpack.c.l.b16 %v1152
        %v1204 = vunpack.c.h.b16 %v1152
        %v1205 = vunpack.c.l.b16 %v1153
        %v1206 = vunpack.c.h.b16 %v1153
        %v1207 = vunpack.c.l.b16 %v1154
        %v1208 = vunpack.c.h.b16 %v1154
        %v1209 = vpack.c.b16 %v1203, %v1201
        %v1210 = vpack.c.b16 %v1204, %v1202
        %v1211 = vpack.c.b16 %v1207, %v1205
        %v1212 = vpack.c.b16 %v1208, %v1206
        %v1233 = vunpack.c.l.b16 %v1155
        %v1234 = vunpack.c.l.b16 %v1156
        %v1235 = vunpack.c.l.b16 %v1157
        %v1236 = vunpack.c.l.b16 %v1158
        %v1237 = vunpack.c.l.b16 %v1159
        %v1238 = vunpack.c.l.b16 %v1160
        %v1239 = vunpack.c.l.b16 %v1161
        %v1240 = vunpack.c.l.b16 %v1162
        %v1241 = vunpack.c.l.b16 %v1163
        %v1242 = vunpack.c.l.b16 %v1164
        %v1243 = vunpack.c.l.b16 %v1165
        %v1244 = vunpack.c.l.b16 %v1166
        %v1245 = vunpack.c.l.b16 %v1167
        %v1246 = vunpack.c.l.b16 %v1168
        %v1247 = vunpack.c.l.b16 %v1169
        %v1248 = vunpack.c.l.b16 %v1170
        %v1249 = vunpack.c.l.b16 %v1171
        %v1250 = vunpack.c.l.b16 %v1172
        %v1251 = vpack.c.b16 %v1234, %v1233
        %v1252 = vpack.c.b16 %v1236, %v1235
        %v1253 = vpack.c.b16 %v1238, %v1237
        %v1254 = vpack.c.b16 %v1240, %v1239
        %v1255 = vpack.c.b16 %v1242, %v1241
        %v1256 = vpack.c.b16 %v1244, %v1243
        %v1257 = vpack.c.b16 %v1246, %v1245
        %v1258 = vpack.c.b16 %v1248, %v1247
        %v1259 = vpack.c.b16 %v1250, %v1249
        %vm1269 = vcmask 130048
        %v1271 = vsel %vm1269, %v1210, 0
        %v1274 = vsel %vm1269, %v1212, 0
        %1276 = vmatpush.bf16.msra.mxu0 %v1258
        %1277 = vmatpush.bf16.msra.mxu0 %v1257
        %1278 = vmatpush.bf16.msra.mxu0 %v1256
        %1279 = vmatpush.bf16.msra.mxu0 %v1255
        %1280 = vmatpush.bf16.msra.mxu0 %v1254
        %1281 = vmatpush.bf16.msra.mxu0 %v1253
        %1282 = vmatpush.bf16.msra.mxu0 %v1252
        %1283 = vmatpush.bf16.msra.mxu0 %v1251
        %1284 = vmatmul.bf16.gmra.mxu0 %v1209
        %v1285 = vpop.f32.mrf.mxu0
        %v1286 = vadd.f32 %v1180, %v1285
        %v1287 = vpop.f32.mrf.mxu0
        %v1288 = vadd.f32 %v1185, %v1287
        %1289 = vmatmul.bf16.gmra.mxu0 %v1211
        %v1290 = vpop.f32.mrf.mxu0
        %v1291 = vadd.f32 %v1190, %v1290
        %v1292 = vpop.f32.mrf.mxu0
        %v1293 = vadd.f32 %v1195, %v1292
        %1294 = vdwg.mxu0
        %1295 = vmatpush.bf16.msra.mxu0 0
        %1296 = vmatpush.bf16.msra.mxu0 0
        %1297 = vmatpush.bf16.msra.mxu0 0
        %1298 = vmatpush.bf16.msra.mxu0 0
        %1299 = vmatpush.bf16.msra.mxu0 0
        %1300 = vmatpush.bf16.msra.mxu0 0
        %1301 = vmatpush.bf16.msra.mxu0 0
        %1302 = vmatpush.bf16.msra.mxu0 %v1259
        %1303 = vmatmul.bf16.gmra.mxu0 %v1271
        %v1304 = vpop.f32.mrf.mxu0
        %v1305 = vadd.f32 %v1286, %v1304
        %v1306 = vpop.f32.mrf.mxu0
        %v1307 = vadd.f32 %v1288, %v1306
        %1308 = vmatmul.bf16.gmra.mxu0 %v1274
        %v1309 = vpop.f32.mrf.mxu0
        %v1310 = vadd.f32 %v1291, %v1309
        %v1311 = vpop.f32.mrf.mxu0
        %v1312 = vadd.f32 %v1293, %v1311
        %1313 = vdwg.mxu0
        %v1314 = vmax.f32 %v1305, 0.0
        %v1315 = vmax.f32 %v1307, 0.0
        %v1316 = vmax.f32 %v1310, 0.0
        %v1317 = vmax.f32 %v1312, 0.0
        %vm1318 = vcmask 1048064
        %1319 = vst.msk [vmem:[#allocation7] sm:$0xff] %vm1318, 0.0
        %1320 = vst.msk [vmem:[#allocation7 + $0x8] sm:$0xff] %vm1318, 0.0
        %1321 = vst.msk [vmem:[#allocation7 + $0x10] sm:$0xff] %vm1318, 0.0
        %1322 = vst.msk [vmem:[#allocation7 + $0x18] sm:$0xff] %vm1318, 0.0
        %vm1323 = vcmask 523264
        %1324 = vst.msk [vmem:[#allocation7] sm:$0xff] %vm1323, %v1314
        %1325 = vst.msk [vmem:[#allocation7 + $0x8] sm:$0xff] %vm1323, %v1315
        %1326 = vst.msk [vmem:[#allocation7 + $0x10] sm:$0xff] %vm1323, %v1316
        %1327 = vst.msk [vmem:[#allocation7 + $0x18] sm:$0xff] %vm1323, %v1317
        %v1328 = vld [vmem:[#allocation7] sm:$0xff]
        %v1329 = vld [vmem:[#allocation7 + $0x8] sm:$0xff]
        %v1330 = vld [vmem:[#allocation7 + $0x10] sm:$0xff]
        %v1331 = vld [vmem:[#allocation7 + $0x18] sm:$0xff]
        %1336 = vrot.lane.b32.xlu0 %v1328, 127
        %v1337 = vpop.permute.xlu0 %1336
        %1338 = vrot.lane.b32.xlu0 %v1329, 127
        %v1339 = vpop.permute.xlu0 %1338
        %1340 = vrot.lane.b32.xlu0 %v1330, 127
        %v1341 = vpop.permute.xlu0 %1340
        %1342 = vrot.lane.b32.xlu0 %v1331, 127
        %v1343 = vpop.permute.xlu0 %1342
        %v1348 = vmax.f32 %v1314, %v1337
        %v1349 = vmax.f32 %v1315, %v1339
        %v1350 = vmax.f32 %v1316, %v1341
        %v1351 = vmax.f32 %v1317, %v1343
        %v1352 = vmax.f32 %v1328, %v1337
        %v1353 = vmax.f32 %v1329, %v1339
        %v1354 = vmax.f32 %v1330, %v1341
        %v1355 = vmax.f32 %v1331, %v1343
        %1360 = vrot.lane.b32.xlu0 %v1352, 120
        %v1361 = vpop.permute.xlu0 %1360
        %1362 = vrot.lane.b32.xlu0 %v1353, 120
        %v1363 = vpop.permute.xlu0 %1362
        %1364 = vrot.lane.b32.xlu0 %v1354, 120
        %v1365 = vpop.permute.xlu0 %1364
        %1366 = vrot.lane.b32.xlu0 %v1355, 120
        %v1367 = vpop.permute.xlu0 %1366
        %v1372 = vmax.f32 %v1348, %v1361
        %v1373 = vmax.f32 %v1349, %v1363
        %v1374 = vmax.f32 %v1350, %v1365
        %v1375 = vmax.f32 %v1351, %v1367
        %v1376 = vld [vmem:[%s6] sm:$0xff]
        %v1377 = vld [vmem:[%s6 + $0x8] sm:$0xff]
        %v1378 = vld [vmem:[%s6 + $0x10] sm:$0xff]
        %v1379 = vld [vmem:[%s6 + $0x18] sm:$0xff]
        %v1380 = vld [vmem:[%s6 + $0x20] sm:$0xff]
        %v1381 = vld [vmem:[%s6 + $0x28] sm:$0xff]
        %v1382 = vld [vmem:[%s6 + $0x30] sm:$0xff]
        %v1383 = vld [vmem:[%s6 + $0x38] sm:$0xff]
        %v1385 = vsel %vm1323, %v1372, 0
        %v1388 = vsel %vm1323, %v1373, 0
        %v1391 = vsel %vm1323, %v1374, 0
        %v1394 = vsel %vm1323, %v1375, 0
        %1396 = vmatpush.msra.mxu0 0.0
        %1397 = vmatpush.msra.mxu0 0.0
        %1398 = vmatpush.msra.mxu0 0.0
        %1399 = vmatpush.msra.mxu0 0.0
        %1400 = vmatpush.msra.mxu0 0.0
        %1401 = vmatpush.msra.mxu0 0.0
        %1402 = vmatpush.msra.mxu0 0.0
        %1403 = vmatpush.msra.mxu0 0.0
        %1404 = vmatpush.msra.mxu0 %v1383
        %1405 = vmatpush.msra.mxu0 %v1382
        %1406 = vmatpush.msra.mxu0 %v1381
        %1407 = vmatpush.msra.mxu0 %v1380
        %1408 = vmatpush.msra.mxu0 %v1379
        %1409 = vmatpush.msra.mxu0 %v1378
        %1410 = vmatpush.msra.mxu0 %v1377
        %1411 = vmatpush.msra.mxu0 %v1376
        %1412 = vmatmul.f32.gmra.mxu0 %v1385
        %v1413 = vpop.f32.mrf.mxu0
        %v1414 = vadd.f32 0.0, %v1413
        %1415 = vmatmul.f32.gmra.mxu0 %v1388
        %v1416 = vpop.f32.mrf.mxu0
        %v1417 = vadd.f32 0.0, %v1416
        %1418 = vmatmul.f32.gmra.mxu0 %v1391
        %v1419 = vpop.f32.mrf.mxu0
        %v1420 = vadd.f32 0.0, %v1419
        %1421 = vmatmul.f32.gmra.mxu0 %v1394
        %v1422 = vpop.f32.mrf.mxu0
        %v1423 = vadd.f32 0.0, %v1422
        %1424 = vdwg.mxu0
        %1425 = vst.msk [vmem:[#allocation8] sm:$0xff] %vm1269, %v1414
        %1426 = vst.msk [vmem:[#allocation8 + $0x8] sm:$0xff] %vm1269, %v1417
        %1427 = vst.msk [vmem:[#allocation8 + $0x10] sm:$0xff] %vm1269, %v1420
        %1428 = vst.msk [vmem:[#allocation8 + $0x18] sm:$0xff] %vm1269, %v1423
        %v1429 = vld [vmem:[#allocation8] sm:$0x3]
        %v1430 = vpack.c.bf16 %v1429, %v1429
        %v1431 = vld [vmem:[%s7] sm:$0xf]
        %v1432 = vld [vmem:[%s7 + $0x4] sm:$0xf]
        %v1433 = vld [vmem:[#allocation8 + $0x2] sm:$0x3]
        %v1434 = vpack.c.bf16 %v1433, %v1433
        %v1435 = vld [vmem:[%s7 + $0x8] sm:$0xf]
        %v1436 = vld [vmem:[%s7 + $0xc] sm:$0xf]
        %v1439 = vunpack.c.l.b16 %v1435
        %v1440 = vunpack.c.l.b16 %v1436
        %v1441 = vpack.c.b16 %v1440, %v1439
        %v1444 = vsel %vm1269, %v1434, 0
        %1446 = vmatpush.bf16.msra.mxu0 0
        %1447 = vmatpush.bf16.msra.mxu0 0
        %1448 = vmatpush.bf16.msra.mxu0 0
        %1449 = vmatpush.bf16.msra.mxu0 0
        %1450 = vmatpush.bf16.msra.mxu0 0
        %1451 = vmatpush.bf16.msra.mxu0 0
        %1452 = vmatpush.bf16.msra.mxu0 0
        %1453 = vmatpush.bf16.msra.mxu0 %v1441
        %1454 = vmatmul.bf16.gmra.mxu0 %v1444
        %v1455 = vpop.f32.mrf.mxu0
        %v1456 = vadd.f32 0.0, %v1455
        %v1457 = vpop.f32.mrf.mxu0
        %1458 = vdwg.mxu0
        %v1461 = vunpack.c.l.b16 %v1431
        %v1462 = vunpack.c.l.b16 %v1432
        %v1463 = vpack.c.b16 %v1462, %v1461
        %v1466 = vsel %vm1269, %v1430, 0
        %1468 = vmatpush.bf16.msra.mxu0 0
        %1469 = vmatpush.bf16.msra.mxu0 0
        %1470 = vmatpush.bf16.msra.mxu0 0
        %1471 = vmatpush.bf16.msra.mxu0 0
        %1472 = vmatpush.bf16.msra.mxu0 0
        %1473 = vmatpush.bf16.msra.mxu0 0
        %1474 = vmatpush.bf16.msra.mxu0 0
        %1475 = vmatpush.bf16.msra.mxu0 %v1463
        %1476 = vmatmul.bf16.gmra.mxu0 %v1466
        %v1477 = vpop.f32.mrf.mxu0
        %v1478 = vadd.f32 %v1456, %v1477
        %v1479 = vpop.f32.mrf.mxu0
        %1480 = vdwg.mxu0
        %v1481 = vld [vmem:[#allocation8 + $0x4] sm:$0x3]
        %v1482 = vpack.c.bf16 %v1481, %v1481
        %v1483 = vld [vmem:[%s7 + $0x10] sm:$0xf]
        %v1484 = vld [vmem:[%s7 + $0x14] sm:$0xf]
        %v1487 = vunpack.c.l.b16 %v1483
        %v1488 = vunpack.c.l.b16 %v1484
        %v1489 = vpack.c.b16 %v1488, %v1487
        %v1492 = vsel %vm1269, %v1482, 0
        %1494 = vmatpush.bf16.msra.mxu0 0
        %1495 = vmatpush.bf16.msra.mxu0 0
        %1496 = vmatpush.bf16.msra.mxu0 0
        %1497 = vmatpush.bf16.msra.mxu0 0
        %1498 = vmatpush.bf16.msra.mxu0 0
        %1499 = vmatpush.bf16.msra.mxu0 0
        %1500 = vmatpush.bf16.msra.mxu0 0
        %1501 = vmatpush.bf16.msra.mxu0 %v1489
        %1502 = vmatmul.bf16.gmra.mxu0 %v1492
        %v1503 = vpop.f32.mrf.mxu0
        %v1504 = vadd.f32 0.0, %v1503
        %v1505 = vpop.f32.mrf.mxu0
        %1506 = vdwg.mxu0
        %v1507 = vadd.f32 %v1478, %v1504
        %v1508 = vld [vmem:[#allocation8 + $0x6] sm:$0x3]
        %v1509 = vpack.c.bf16 %v1508, %v1508
        %v1510 = vld [vmem:[%s7 + $0x18] sm:$0xf]
        %v1511 = vld [vmem:[%s7 + $0x1c] sm:$0xf]
        %v1514 = vunpack.c.l.b16 %v1510
        %v1515 = vunpack.c.l.b16 %v1511
        %v1516 = vpack.c.b16 %v1515, %v1514
        %v1519 = vsel %vm1269, %v1509, 0
        %1521 = vmatpush.bf16.msra.mxu0 0
        %1522 = vmatpush.bf16.msra.mxu0 0
        %1523 = vmatpush.bf16.msra.mxu0 0
        %1524 = vmatpush.bf16.msra.mxu0 0
        %1525 = vmatpush.bf16.msra.mxu0 0
        %1526 = vmatpush.bf16.msra.mxu0 0
        %1527 = vmatpush.bf16.msra.mxu0 0
        %1528 = vmatpush.bf16.msra.mxu0 %v1516
        %1529 = vmatmul.bf16.gmra.mxu0 %v1519
        %v1530 = vpop.f32.mrf.mxu0
        %v1531 = vadd.f32 0.0, %v1530
        %v1532 = vpop.f32.mrf.mxu0
        %1533 = vdwg.mxu0
        %v1534 = vadd.f32 %v1507, %v1531
        %v1535 = vld [vmem:[#allocation8 + $0x8] sm:$0x3]
        %v1536 = vpack.c.bf16 %v1535, %v1535
        %v1537 = vld [vmem:[%s7 + $0x20] sm:$0xf]
        %v1538 = vld [vmem:[%s7 + $0x24] sm:$0xf]
        %v1541 = vunpack.c.l.b16 %v1537
        %v1542 = vunpack.c.l.b16 %v1538
        %v1543 = vpack.c.b16 %v1542, %v1541
        %v1546 = vsel %vm1269, %v1536, 0
        %1548 = vmatpush.bf16.msra.mxu0 0
        %1549 = vmatpush.bf16.msra.mxu0 0
        %1550 = vmatpush.bf16.msra.mxu0 0
        %1551 = vmatpush.bf16.msra.mxu0 0
        %1552 = vmatpush.bf16.msra.mxu0 0
        %1553 = vmatpush.bf16.msra.mxu0 0
        %1554 = vmatpush.bf16.msra.mxu0 0
        %1555 = vmatpush.bf16.msra.mxu0 %v1543
        %1556 = vmatmul.bf16.gmra.mxu0 %v1546
        %v1557 = vpop.f32.mrf.mxu0
        %v1558 = vadd.f32 0.0, %v1557
        %v1559 = vpop.f32.mrf.mxu0
        %1560 = vdwg.mxu0
        %v1561 = vadd.f32 %v1534, %v1558
        %v1562 = vld [vmem:[#allocation8 + $0xa] sm:$0x3]
        %v1563 = vpack.c.bf16 %v1562, %v1562
        %v1564 = vld [vmem:[%s7 + $0x28] sm:$0xf]
        %v1565 = vld [vmem:[%s7 + $0x2c] sm:$0xf]
        %v1568 = vunpack.c.l.b16 %v1564
        %v1569 = vunpack.c.l.b16 %v1565
        %v1570 = vpack.c.b16 %v1569, %v1568
        %v1573 = vsel %vm1269, %v1563, 0
        %1575 = vmatpush.bf16.msra.mxu0 0
        %1576 = vmatpush.bf16.msra.mxu0 0
        %1577 = vmatpush.bf16.msra.mxu0 0
        %1578 = vmatpush.bf16.msra.mxu0 0
        %1579 = vmatpush.bf16.msra.mxu0 0
        %1580 = vmatpush.bf16.msra.mxu0 0
        %1581 = vmatpush.bf16.msra.mxu0 0
        %1582 = vmatpush.bf16.msra.mxu0 %v1570
        %1583 = vmatmul.bf16.gmra.mxu0 %v1573
        %v1584 = vpop.f32.mrf.mxu0
        %v1585 = vadd.f32 0.0, %v1584
        %v1586 = vpop.f32.mrf.mxu0
        %1587 = vdwg.mxu0
        %v1588 = vadd.f32 %v1561, %v1585
        %v1589 = vld [vmem:[#allocation8 + $0xc] sm:$0x3]
        %v1590 = vpack.c.bf16 %v1589, %v1589
        %v1591 = vld [vmem:[%s7 + $0x30] sm:$0xf]
        %v1592 = vld [vmem:[%s7 + $0x34] sm:$0xf]
        %v1595 = vunpack.c.l.b16 %v1591
        %v1596 = vunpack.c.l.b16 %v1592
        %v1597 = vpack.c.b16 %v1596, %v1595
        %v1600 = vsel %vm1269, %v1590, 0
        %1602 = vmatpush.bf16.msra.mxu0 0
        %1603 = vmatpush.bf16.msra.mxu0 0
        %1604 = vmatpush.bf16.msra.mxu0 0
        %1605 = vmatpush.bf16.msra.mxu0 0
        %1606 = vmatpush.bf16.msra.mxu0 0
        %1607 = vmatpush.bf16.msra.mxu0 0
        %1608 = vmatpush.bf16.msra.mxu0 0
        %1609 = vmatpush.bf16.msra.mxu0 %v1597
        %1610 = vmatmul.bf16.gmra.mxu0 %v1600
        %v1611 = vpop.f32.mrf.mxu0
        %v1612 = vadd.f32 0.0, %v1611
        %v1613 = vpop.f32.mrf.mxu0
        %1614 = vdwg.mxu0
        %v1615 = vadd.f32 %v1588, %v1612
        %v1616 = vld [vmem:[#allocation8 + $0xe] sm:$0x3]
        %v1617 = vpack.c.bf16 %v1616, %v1616
        %v1618 = vld [vmem:[%s7 + $0x38] sm:$0xf]
        %v1619 = vld [vmem:[%s7 + $0x3c] sm:$0xf]
        %v1622 = vunpack.c.l.b16 %v1618
        %v1623 = vunpack.c.l.b16 %v1619
        %v1624 = vpack.c.b16 %v1623, %v1622
        %v1627 = vsel %vm1269, %v1617, 0
        %1629 = vmatpush.bf16.msra.mxu0 0
        %1630 = vmatpush.bf16.msra.mxu0 0
        %1631 = vmatpush.bf16.msra.mxu0 0
        %1632 = vmatpush.bf16.msra.mxu0 0
        %1633 = vmatpush.bf16.msra.mxu0 0
        %1634 = vmatpush.bf16.msra.mxu0 0
        %1635 = vmatpush.bf16.msra.mxu0 0
        %1636 = vmatpush.bf16.msra.mxu0 %v1624
        %1637 = vmatmul.bf16.gmra.mxu0 %v1627
        %v1638 = vpop.f32.mrf.mxu0
        %v1639 = vadd.f32 0.0, %v1638
        %v1640 = vpop.f32.mrf.mxu0
        %1641 = vdwg.mxu0
        %v1642 = vadd.f32 %v1615, %v1639
        %v1643 = vld [vmem:[#allocation8 + $0x10] sm:$0x3]
        %v1644 = vpack.c.bf16 %v1643, %v1643
        %v1645 = vld [vmem:[%s7 + $0x40] sm:$0xf]
        %v1646 = vld [vmem:[%s7 + $0x44] sm:$0xf]
        %v1649 = vunpack.c.l.b16 %v1645
        %v1650 = vunpack.c.l.b16 %v1646
        %v1651 = vpack.c.b16 %v1650, %v1649
        %v1654 = vsel %vm1269, %v1644, 0
        %1656 = vmatpush.bf16.msra.mxu0 0
        %1657 = vmatpush.bf16.msra.mxu0 0
        %1658 = vmatpush.bf16.msra.mxu0 0
        %1659 = vmatpush.bf16.msra.mxu0 0
        %1660 = vmatpush.bf16.msra.mxu0 0
        %1661 = vmatpush.bf16.msra.mxu0 0
        %1662 = vmatpush.bf16.msra.mxu0 0
        %1663 = vmatpush.bf16.msra.mxu0 %v1651
        %1664 = vmatmul.bf16.gmra.mxu0 %v1654
        %v1665 = vpop.f32.mrf.mxu0
        %v1666 = vadd.f32 0.0, %v1665
        %v1667 = vpop.f32.mrf.mxu0
        %1668 = vdwg.mxu0
        %v1669 = vadd.f32 %v1642, %v1666
        %v1670 = vld [vmem:[#allocation8 + $0x12] sm:$0x3]
        %v1671 = vpack.c.bf16 %v1670, %v1670
        %v1672 = vld [vmem:[%s7 + $0x48] sm:$0xf]
        %v1673 = vld [vmem:[%s7 + $0x4c] sm:$0xf]
        %v1676 = vunpack.c.l.b16 %v1672
        %v1677 = vunpack.c.l.b16 %v1673
        %v1678 = vpack.c.b16 %v1677, %v1676
        %v1681 = vsel %vm1269, %v1671, 0
        %1683 = vmatpush.bf16.msra.mxu0 0
        %1684 = vmatpush.bf16.msra.mxu0 0
        %1685 = vmatpush.bf16.msra.mxu0 0
        %1686 = vmatpush.bf16.msra.mxu0 0
        %1687 = vmatpush.bf16.msra.mxu0 0
        %1688 = vmatpush.bf16.msra.mxu0 0
        %1689 = vmatpush.bf16.msra.mxu0 0
        %1690 = vmatpush.bf16.msra.mxu0 %v1678
        %1691 = vmatmul.bf16.gmra.mxu0 %v1681
        %v1692 = vpop.f32.mrf.mxu0
        %v1693 = vadd.f32 0.0, %v1692
        %v1694 = vpop.f32.mrf.mxu0
        %1695 = vdwg.mxu0
        %v1696 = vadd.f32 %v1669, %v1693
        %v1697 = vld [vmem:[#allocation8 + $0x14] sm:$0x3]
        %v1698 = vpack.c.bf16 %v1697, %v1697
        %v1699 = vld [vmem:[%s7 + $0x50] sm:$0xf]
        %v1700 = vld [vmem:[%s7 + $0x54] sm:$0xf]
        %v1703 = vunpack.c.l.b16 %v1699
        %v1704 = vunpack.c.l.b16 %v1700
        %v1705 = vpack.c.b16 %v1704, %v1703
        %v1708 = vsel %vm1269, %v1698, 0
        %1710 = vmatpush.bf16.msra.mxu0 0
        %1711 = vmatpush.bf16.msra.mxu0 0
        %1712 = vmatpush.bf16.msra.mxu0 0
        %1713 = vmatpush.bf16.msra.mxu0 0
        %1714 = vmatpush.bf16.msra.mxu0 0
        %1715 = vmatpush.bf16.msra.mxu0 0
        %1716 = vmatpush.bf16.msra.mxu0 0
        %1717 = vmatpush.bf16.msra.mxu0 %v1705
        %1718 = vmatmul.bf16.gmra.mxu0 %v1708
        %v1719 = vpop.f32.mrf.mxu0
        %v1720 = vadd.f32 0.0, %v1719
        %v1721 = vpop.f32.mrf.mxu0
        %1722 = vdwg.mxu0
        %v1723 = vadd.f32 %v1696, %v1720
        %v1724 = vld [vmem:[#allocation8 + $0x16] sm:$0x3]
        %v1725 = vpack.c.bf16 %v1724, %v1724
        %v1726 = vld [vmem:[%s7 + $0x58] sm:$0xf]
        %v1727 = vld [vmem:[%s7 + $0x5c] sm:$0xf]
        %v1730 = vunpack.c.l.b16 %v1726
        %v1731 = vunpack.c.l.b16 %v1727
        %v1732 = vpack.c.b16 %v1731, %v1730
        %v1735 = vsel %vm1269, %v1725, 0
        %1737 = vmatpush.bf16.msra.mxu0 0
        %1738 = vmatpush.bf16.msra.mxu0 0
        %1739 = vmatpush.bf16.msra.mxu0 0
        %1740 = vmatpush.bf16.msra.mxu0 0
        %1741 = vmatpush.bf16.msra.mxu0 0
        %1742 = vmatpush.bf16.msra.mxu0 0
        %1743 = vmatpush.bf16.msra.mxu0 0
        %1744 = vmatpush.bf16.msra.mxu0 %v1732
        %1745 = vmatmul.bf16.gmra.mxu0 %v1735
        %v1746 = vpop.f32.mrf.mxu0
        %v1747 = vadd.f32 0.0, %v1746
        %v1748 = vpop.f32.mrf.mxu0
        %1749 = vdwg.mxu0
        %v1750 = vadd.f32 %v1723, %v1747
        %v1751 = vld [vmem:[#allocation8 + $0x18] sm:$0x3]
        %v1752 = vpack.c.bf16 %v1751, %v1751
        %v1753 = vld [vmem:[%s7 + $0x60] sm:$0xf]
        %v1754 = vld [vmem:[%s7 + $0x64] sm:$0xf]
        %v1757 = vunpack.c.l.b16 %v1753
        %v1758 = vunpack.c.l.b16 %v1754
        %v1759 = vpack.c.b16 %v1758, %v1757
        %v1762 = vsel %vm1269, %v1752, 0
        %1764 = vmatpush.bf16.msra.mxu0 0
        %1765 = vmatpush.bf16.msra.mxu0 0
        %1766 = vmatpush.bf16.msra.mxu0 0
        %1767 = vmatpush.bf16.msra.mxu0 0
        %1768 = vmatpush.bf16.msra.mxu0 0
        %1769 = vmatpush.bf16.msra.mxu0 0
        %1770 = vmatpush.bf16.msra.mxu0 0
        %1771 = vmatpush.bf16.msra.mxu0 %v1759
        %1772 = vmatmul.bf16.gmra.mxu0 %v1762
        %v1773 = vpop.f32.mrf.mxu0
        %v1774 = vadd.f32 0.0, %v1773
        %v1775 = vpop.f32.mrf.mxu0
        %1776 = vdwg.mxu0
        %v1777 = vadd.f32 %v1750, %v1774
        %v1778 = vld [vmem:[#allocation8 + $0x1a] sm:$0x3]
        %v1779 = vpack.c.bf16 %v1778, %v1778
        %v1780 = vld [vmem:[%s7 + $0x68] sm:$0xf]
        %v1781 = vld [vmem:[%s7 + $0x6c] sm:$0xf]
        %v1784 = vunpack.c.l.b16 %v1780
        %v1785 = vunpack.c.l.b16 %v1781
        %v1786 = vpack.c.b16 %v1785, %v1784
        %v1789 = vsel %vm1269, %v1779, 0
        %1791 = vmatpush.bf16.msra.mxu0 0
        %1792 = vmatpush.bf16.msra.mxu0 0
        %1793 = vmatpush.bf16.msra.mxu0 0
        %1794 = vmatpush.bf16.msra.mxu0 0
        %1795 = vmatpush.bf16.msra.mxu0 0
        %1796 = vmatpush.bf16.msra.mxu0 0
        %1797 = vmatpush.bf16.msra.mxu0 0
        %1798 = vmatpush.bf16.msra.mxu0 %v1786
        %1799 = vmatmul.bf16.gmra.mxu0 %v1789
        %v1800 = vpop.f32.mrf.mxu0
        %v1801 = vadd.f32 0.0, %v1800
        %v1802 = vpop.f32.mrf.mxu0
        %1803 = vdwg.mxu0
        %v1804 = vadd.f32 %v1777, %v1801
        %v1805 = vld [vmem:[#allocation8 + $0x1c] sm:$0x3]
        %v1806 = vpack.c.bf16 %v1805, %v1805
        %v1807 = vld [vmem:[%s7 + $0x70] sm:$0xf]
        %v1808 = vld [vmem:[%s7 + $0x74] sm:$0xf]
        %v1811 = vunpack.c.l.b16 %v1807
        %v1812 = vunpack.c.l.b16 %v1808
        %v1813 = vpack.c.b16 %v1812, %v1811
        %v1816 = vsel %vm1269, %v1806, 0
        %1818 = vmatpush.bf16.msra.mxu0 0
        %1819 = vmatpush.bf16.msra.mxu0 0
        %1820 = vmatpush.bf16.msra.mxu0 0
        %1821 = vmatpush.bf16.msra.mxu0 0
        %1822 = vmatpush.bf16.msra.mxu0 0
        %1823 = vmatpush.bf16.msra.mxu0 0
        %1824 = vmatpush.bf16.msra.mxu0 0
        %1825 = vmatpush.bf16.msra.mxu0 %v1813
        %1826 = vmatmul.bf16.gmra.mxu0 %v1816
        %v1827 = vpop.f32.mrf.mxu0
        %v1828 = vadd.f32 0.0, %v1827
        %v1829 = vpop.f32.mrf.mxu0
        %1830 = vdwg.mxu0
        %v1831 = vadd.f32 %v1804, %v1828
        %v1832 = vld [vmem:[#allocation8 + $0x1e] sm:$0x3]
        %v1833 = vpack.c.bf16 %v1832, %v1832
        %v1834 = vld [vmem:[%s7 + $0x78] sm:$0xf]
        %v1835 = vld [vmem:[%s7 + $0x7c] sm:$0xf]
        %v1838 = vunpack.c.l.b16 %v1834
        %v1839 = vunpack.c.l.b16 %v1835
        %v1840 = vpack.c.b16 %v1839, %v1838
        %v1843 = vsel %vm1269, %v1833, 0
        %1845 = vmatpush.bf16.msra.mxu0 0
        %1846 = vmatpush.bf16.msra.mxu0 0
        %1847 = vmatpush.bf16.msra.mxu0 0
        %1848 = vmatpush.bf16.msra.mxu0 0
        %1849 = vmatpush.bf16.msra.mxu0 0
        %1850 = vmatpush.bf16.msra.mxu0 0
        %1851 = vmatpush.bf16.msra.mxu0 0
        %1852 = vmatpush.bf16.msra.mxu0 %v1840
        %1853 = vmatmul.bf16.gmra.mxu0 %v1843
        %v1854 = vpop.f32.mrf.mxu0
        %v1855 = vadd.f32 0.0, %v1854
        %v1856 = vpop.f32.mrf.mxu0
        %1857 = vdwg.mxu0
        %v1858 = vadd.f32 %v1831, %v1855
        %v1859 = vld [vmem:[%s8] sm:$0x1]
        %v1861 = vperm.slane %v1859, 0
        %v1863 = vadd.f32 %v1858, %v1861
        %v1864 = vmax.f32 %v1863, 0.0
        %v1865 = vpack.c.bf16 %v1864, %v1864
        %v1866 = vld [vmem:[%s9] sm:$0xf]
        %v1867 = vld [vmem:[%s9 + $0x4] sm:$0xf]
        %v1868 = vld [vmem:[%s9 + $0x8] sm:$0xf]
        %v1869 = vld [vmem:[%s9 + $0xc] sm:$0xf]
        %v1870 = vld [vmem:[%s9 + $0x10] sm:$0xf]
        %v1871 = vld [vmem:[%s9 + $0x14] sm:$0xf]
        %v1872 = vld [vmem:[%s9 + $0x18] sm:$0xf]
        %v1873 = vld [vmem:[%s9 + $0x1c] sm:$0xf]
        %v1874 = vld [vmem:[%s10] sm:$0x1]
        %v1876 = vperm.slane %v1874, 0
        %v1886 = vunpack.c.l.b16 %v1866
        %v1887 = vunpack.c.l.b16 %v1867
        %v1888 = vunpack.c.l.b16 %v1868
        %v1889 = vunpack.c.l.b16 %v1869
        %v1890 = vunpack.c.l.b16 %v1870
        %v1891 = vunpack.c.l.b16 %v1871
        %v1892 = vunpack.c.l.b16 %v1872
        %v1893 = vunpack.c.l.b16 %v1873
        %v1894 = vpack.c.b16 %v1887, %v1886
        %v1895 = vpack.c.b16 %v1889, %v1888
        %v1896 = vpack.c.b16 %v1891, %v1890
        %v1897 = vpack.c.b16 %v1893, %v1892
        %v1903 = vsel %vm1323, %v1865, 0
        %1905 = vmatpush.bf16.msra.mxu0 0
        %1906 = vmatpush.bf16.msra.mxu0 0
        %1907 = vmatpush.bf16.msra.mxu0 0
        %1908 = vmatpush.bf16.msra.mxu0 0
        %1909 = vmatpush.bf16.msra.mxu0 %v1897
        %1910 = vmatpush.bf16.msra.mxu0 %v1896
        %1911 = vmatpush.bf16.msra.mxu0 %v1895
        %1912 = vmatpush.bf16.msra.mxu0 %v1894
        %1913 = vmatmul.bf16.gmra.mxu0 %v1903
        %v1914 = vpop.f32.mrf.mxu0
        %v1915 = vadd.f32 %v1876, %v1914
        %v1916 = vpop.f32.mrf.mxu0
        %1917 = vdwg.mxu0
        %v1918 = vmax.f32 %v1915, 0.0
        %v1919 = vpack.c.bf16 %v1918, %v1918
        %v1920 = vld [vmem:[%s11] sm:$0xf]
        %v1921 = vld [vmem:[%s11 + $0x4] sm:$0xf]
        %v1922 = vld [vmem:[%s11 + $0x8] sm:$0xf]
        %v1923 = vld [vmem:[%s11 + $0xc] sm:$0xf]
        %v1924 = vld [vmem:[%s12] sm:$0x1]
        %v1926 = vperm.slane %v1924, 0
        %v1932 = vunpack.c.l.b16 %v1920
        %v1933 = vunpack.c.l.b16 %v1921
        %v1934 = vunpack.c.l.b16 %v1922
        %v1935 = vunpack.c.l.b16 %v1923
        %v1936 = vpack.c.b16 %v1933, %v1932
        %v1937 = vpack.c.b16 %v1935, %v1934
        %vm1940 = vcmask 261120
        %v1942 = vsel %vm1940, %v1919, 0
        %1944 = vmatpush.bf16.msra.mxu0 0
        %1945 = vmatpush.bf16.msra.mxu0 0
        %1946 = vmatpush.bf16.msra.mxu0 0
        %1947 = vmatpush.bf16.msra.mxu0 0
        %1948 = vmatpush.bf16.msra.mxu0 0
        %1949 = vmatpush.bf16.msra.mxu0 0
        %1950 = vmatpush.bf16.msra.mxu0 %v1937
        %1951 = vmatpush.bf16.msra.mxu0 %v1936
        %1952 = vmatmul.bf16.gmra.mxu0 %v1942
        %v1953 = vpop.f32.mrf.mxu0
        %v1954 = vadd.f32 %v1926, %v1953
        %v1955 = vpop.f32.mrf.mxu0
        %1956 = vdwg.mxu0
        %1957 = vst [vmem:[%s433] sm:$0x3] %v1954
        %s1958 = sand.u32 %s313, 1
        %s1959 = scalar_lea.sflag [#allocation10], %s1958
        %s1960 = sand.u32 %s313, 1
        %s1961 = smul.addr %s1960, 2
        %s1962 = scalar_lea.vmem [#allocation9], %s1961
        // Predicated region
        $region73: #{tpu_custom_call.1} parent=71 // pred_check
          %p1963 = pneg %p323
        $region74: #{tpu_custom_call.1} parent=71 // pred_check_branch
          %1965 = sbr.rel (%p1963) target = $region76
        $region75: #{tpu_custom_call.1} parent=71 // pred_region
          %1967 = vsyncadd %s1959, 0
          %s1968 = smul.addr %s27, 2
          %s1969 = scalar_lea.hbm %s13, %s1968
          %s1971 = sshll.u32 %s1962, 4
          %s1972 = int_to_ptr.vmem [resolvable:$true] %s1971
          %s1973 = sshll.u32 %s1969, 4
          %s1974 = int_to_ptr.hbm [resolvable:$true] %s1973
          %1976 = dma.vmem_to_hbm [thread:$0]  %s1972, 32, %s1974, %s1959
        $region76: #{tpu_custom_call.1} parent=71 // pred_fallthru
          _
      $region72: #{tpu_custom_call.1} parent=5 // pred_fallthru
        _
      %p1977 = scmp.le.s32.totalorder 2, %s22
      // Predicated region
      $region77: #{tpu_custom_call.1} parent=5 // pred_check
        %p1978 = pneg %p1977
      $region78: #{tpu_custom_call.1} parent=5 // pred_check_branch
        %1980 = sbr.rel (%p1978) target = $region80
      $region79: #{tpu_custom_call.1} parent=5 // pred_region
        %s1981 = ssub.s32 %s22, 2
        // Predicated region
        $region81: #{tpu_custom_call.1} parent=79 // pred_check
          %p1982 = pneg %p329
        $region82: #{tpu_custom_call.1} parent=79 // pred_check_branch
          %1984 = sbr.rel (%p1982) target = $region84
        $region83: #{tpu_custom_call.1} parent=79 // pred_region
          %s1985 = sand.u32 %s314, 1
          %s1986 = scalar_lea.sflag [#allocation10], %s1985
          %s1987 = sand.u32 %s314, 1
          %s1988 = smul.addr %s1987, 2
          %s1989 = scalar_lea.vmem [#allocation9], %s1988
          %1991 = dma.done %s1986, 32
        $region84: #{tpu_custom_call.1} parent=79 // pred_fallthru
          _
      $region80: #{tpu_custom_call.1} parent=5 // pred_fallthru
        _
    $region6: #{tpu_custom_call.1} parent=1 // loop_footer
      %s26 = sadd.s32 1, %s22
    $region7: #{tpu_custom_call.1} parent=1 // loop_footer_branch
      %21 = sbr.rel target = $region3
    $region8: #{tpu_custom_call.1} parent=1 // loop_exit
      _
    %1992 = vsyncpa [#allocation10], 1
    %s1993 = scalar_lea.sflag [#allocation10], 1
    %1994 = vsyncpa %s1993, 1

</llo_original>
